<compile_context>
chip_gen: v7x
topology: tpu7x:2x2x1
jax: 0.10.0
libtpu: 0.0.40
codegen_flags: <defaults>
</compile_context>

<pallas_src>
import functools

import jax
import jax.numpy as jnp
from jax.experimental import pallas as pl
from jax.experimental.pallas import tpu as pltpu

NUM_RES_BLOCKS = 5
D_LAYERS = 512
DOUT_PAD = 8          # per-head output columns (4 quat / 3 covar, padded to 8)


# --------------------------- Pallas kernel: trunk + one head-group per grid step ---------------------------

def _quatnet_head_group_kernel(x_ref, rw_ref, rb_ref, w0_ref, b0a_ref, w1_ref, b1_ref, o_ref):
    """One grid step = sensor trunk (recomputed, tiny) + `hg` GenericHeads.

    x_ref  : (B, D)               f32
    rw_ref : (5, D, D)            f32   residual-block weights (y = x @ W + b)
    rb_ref : (5, 1, D)            f32   residual-block biases
    w0_ref : (1, D, hg*512)       bf16  fc0 weights of this head group (wide matmul)
    b0a_ref: (1, 2, hg*512)       f32   row 0 = fc0 bias, row 1 = per-head PReLU alpha
    w1_ref : (1, hg, 8, 512)      bf16  compact fc1 weights (transposed, lane-dense)
    b1_ref : (1, hg, 1, 8)        f32   fc1 biases
    o_ref  : (1, B, hg*8)         f32   head j of this group -> columns [8j, 8j+4)
    """
    B, D = x_ref.shape
    hg = w1_ref.shape[1]

    # --- sensor_net: 5 residual blocks (relu(x @ W + b) + x), kept in f32 ---
    x = x_ref[...]
    for i in range(NUM_RES_BLOCKS):
        h = jnp.dot(x, rw_ref[i], preferred_element_type=jnp.float32) + rb_ref[i]
        x = jnp.maximum(h, 0.0) + x

    # --- fc0 of every head in this group: one wide (B, D) @ (D, hg*512) MXU matmul ---
    b0a = b0a_ref[0]                                            # (2, hg*512) f32
    h0 = jnp.dot(x.astype(jnp.bfloat16), w0_ref[0],
                 preferred_element_type=jnp.float32) + b0a[0:1, :]
    h0 = jnp.where(h0 >= 0.0, h0, b0a[1:2, :] * h0)             # per-head PReLU

    # --- fc1: compact per-head (512 -> 8) contractions (no block-diagonal zeros) ---
    w1 = w1_ref[0]                                              # (hg, 8, 512) bf16
    b1 = b1_ref[0]                                              # (hg, 1, 8)   f32
    h0_b = h0.astype(jnp.bfloat16)
    outs = []
    for j in range(hg):
        oj = jax.lax.dot_general(
            h0_b[:, j * D_LAYERS:(j + 1) * D_LAYERS], w1[j],
            dimension_numbers=(((1,), (1,)), ((), ())),
            preferred_element_type=jnp.float32) + b1[j]          # (B, 8)
        outs.append(oj)
    o_ref[...] = jnp.concatenate(outs, axis=-1)[None]            # one lane-padded store


def quaternion_net_fused_pallas(x, params):
    """Trunk + all (H+1) heads; grid over head groups ('parallel': pipelined + v7x 2-TC split)."""
    B, D = x.shape
    res_w, res_b = params["res_w"], params["res_b"]
    w0, b0a, w1, b1 = params["w0"], params["b0a"], params["w1"], params["b1"]
    G = w0.shape[0]
    hg = w1.shape[1]
    outg = hg * DOUT_PAD

    # Per-step VMEM footprint (double-buffered by the BlockSpec pipeline) + margin.
    block_bytes = (x.size * 4 + res_w.size * 4 + res_b.size * 4
                   + D * hg * D_LAYERS * 2          # w0 group tile (bf16)
                   + 2 * hg * D_LAYERS * 4          # b0 + alpha
                   + hg * DOUT_PAD * D_LAYERS * 2   # w1 group tile (bf16)
                   + hg * DOUT_PAD * 4              # b1
                   + B * outg * 4)                  # output tile
    vmem_limit = int(min(max(4 * block_bytes + (4 << 20), 16 << 20), 64 << 20))

    return pl.pallas_call(
        _quatnet_head_group_kernel,
        out_shape=jax.ShapeDtypeStruct((G, B, outg), jnp.float32),
        grid_spec=pltpu.PrefetchScalarGridSpec(
            num_scalar_prefetch=0,
            grid=(G,),
            in_specs=[
                pl.BlockSpec((B, D), lambda g: (0, 0)),
                pl.BlockSpec((NUM_RES_BLOCKS, D, D), lambda g: (0, 0, 0)),
                pl.BlockSpec((NUM_RES_BLOCKS, 1, D), lambda g: (0, 0, 0)),
                pl.BlockSpec((1, D, hg * D_LAYERS), lambda g: (g, 0, 0)),
                pl.BlockSpec((1, 2, hg * D_LAYERS), lambda g: (g, 0, 0)),
                pl.BlockSpec((1, hg, DOUT_PAD, D_LAYERS), lambda g: (g, 0, 0, 0)),
                pl.BlockSpec((1, hg, 1, DOUT_PAD), lambda g: (g, 0, 0, 0)),
            ],
            out_specs=pl.BlockSpec((1, B, outg), lambda g: (g, 0, 0)),
        ),
        compiler_params=pltpu.CompilerParams(
            dimension_semantics=("parallel",),
            vmem_limit_bytes=vmem_limit),
    )(x, res_w, res_b, w0, b0a, w1, b1)


# --------------------------- quaternion / covariance helpers (plain-JAX glue) ---------------------------

def normalize_vecs(v):
    n = jnp.linalg.norm(v, axis=-1, keepdims=True)
    return v / jnp.maximum(n, 1e-12)


def positive_fn(x):
    return jax.nn.softplus(x)


def set_quat_sign(q):
    # flip each quaternion to the hemisphere with non-negative scalar (w = last) component
    return jnp.where(q[..., 3:4] < 0.0, -q, q)


def _quat_mult(q1, q2):  # [x, y, z, w]
    v1, w1 = q1[..., :3], q1[..., 3:4]
    v2, w2 = q2[..., :3], q2[..., 3:4]
    w = w1 * w2 - jnp.sum(v1 * v2, axis=-1, keepdims=True)
    v = w1 * v2 + w2 * v1 + jnp.cross(v1, v2)
    return jnp.concatenate([v, w], axis=-1)


def _quat_inv(q):
    return jnp.concatenate([-q[..., :3], q[..., 3:4]], axis=-1)


def _quat_log(q):
    v, w = q[..., :3], q[..., 3:4]
    nv = jnp.linalg.norm(v, axis=-1, keepdims=True)
    angle = 2.0 * jnp.arctan2(nv, w)
    scale = jnp.where(nv > 1e-8, angle / jnp.maximum(nv, 1e-12), 2.0)
    return scale * v


def quat_log_diff(q1, q2):
    dq = _quat_mult(q1, _quat_inv(q2))
    # hemisphere-fix the relative quaternion BEFORE the log map (do not reorder)
    return _quat_log(set_quat_sign(dq))


def batch_sample_covariance(phi):  # phi: (B, M, 3)
    M = phi.shape[1]
    return jnp.einsum("bmi,bmj->bij", phi, phi) / (M - 1)


def _inv3x3(A):
    """Closed-form adjugate inverse of batched 3x3 matrices (pure elementwise VPU work)."""
    a, b, c = A[..., 0, 0], A[..., 0, 1], A[..., 0, 2]
    d, e, f = A[..., 1, 0], A[..., 1, 1], A[..., 1, 2]
    g, h, i = A[..., 2, 0], A[..., 2, 1], A[..., 2, 2]
    A11 = e * i - f * h; A12 = c * h - b * i; A13 = b * f - c * e
    A21 = f * g - d * i; A22 = a * i - c * g; A23 = c * d - a * f
    A31 = d * h - e * g; A32 = b * g - a * h; A33 = a * e - b * d
    det = a * A11 + b * A21 + c * A31
    adj = jnp.stack([jnp.stack([A11, A12, A13], -1),
                     jnp.stack([A21, A22, A23], -1),
                     jnp.stack([A31, A32, A33], -1)], -2)
    return adj / det[..., None, None]


# --------------------------- parameters (grouped / packed for the kernel) ---------------------------

def _linear_params(key, fan_in, fan_out):
    kw, kb = jax.random.split(key)
    bound = 1.0 / float(fan_in) ** 0.5
    w = jax.random.uniform(kw, (fan_in, fan_out), jnp.float32, -bound, bound)
    b = jax.random.uniform(kb, (fan_out,), jnp.float32, -bound, bound)
    return w, b


def _choose_heads_per_group(D, n_heads, target_bytes=2 << 20):
    """Pick heads/group so each grid step streams ~2 MiB of weights (fits double-buffered
    in scoped VMEM on v5e/v6e/v7x) while keeping >=2 groups for pipelining / v7x split."""
    per_head = D * D_LAYERS * 2 + DOUT_PAD * D_LAYERS * 2 + 2 * D_LAYERS * 4 + DOUT_PAD * 4
    hg = max(1, target_bytes // per_head)
    if n_heads >= 2:
        hg = min(hg, (n_heads + 1) // 2)
    return int(min(hg, n_heads))


def init_params(key, d_in_sensor, num_hydra_heads, heads_per_group=None):
    D, H = d_in_sensor, num_hydra_heads
    n_heads = H + 1                                    # H quat heads + 1 covar head
    hg = int(heads_per_group) if heads_per_group else _choose_heads_per_group(D, n_heads)
    G = -(-n_heads // hg)
    n_pad = G * hg                                     # pad head count to a multiple of hg

    keys = jax.random.split(key, NUM_RES_BLOCKS + 2 * n_heads)
    ki = iter(keys)

    # sensor_net residual blocks (kept f32: tiny, bit-closer to the reference)
    res_w, res_b = [], []
    for _ in range(NUM_RES_BLOCKS):
        w, b = _linear_params(next(ki), D, D)
        res_w.append(w)
        res_b.append(b.reshape(1, D))

    douts = [4] * H + [3]
    w0 = jnp.zeros((n_pad, D, D_LAYERS), jnp.float32)
    b0 = jnp.zeros((n_pad, D_LAYERS), jnp.float32)
    alpha = jnp.zeros((n_pad, D_LAYERS), jnp.float32)
    w1 = jnp.zeros((n_pad, DOUT_PAD, D_LAYERS), jnp.float32)   # compact, transposed fc1
    b1 = jnp.zeros((n_pad, DOUT_PAD), jnp.float32)
    for h in range(n_heads):
        hw0, hb0 = _linear_params(next(ki), D, D_LAYERS)
        hw1, hb1 = _linear_params(next(ki), D_LAYERS, douts[h])
        w0 = w0.at[h].set(hw0)
        b0 = b0.at[h].set(hb0)
        alpha = alpha.at[h].set(0.25)                  # torch PReLU init; load trained alphas here
        w1 = w1.at[h, :douts[h], :].set(hw1.T)
        b1 = b1.at[h, :douts[h]].set(hb1)

    # pack per head-group
    w0_g = jnp.transpose(w0.reshape(G, hg, D, D_LAYERS), (0, 2, 1, 3)).reshape(G, D, hg * D_LAYERS)
    b0a = jnp.stack([b0.reshape(G, hg * D_LAYERS), alpha.reshape(G, hg * D_LAYERS)], axis=1)
    w1_g = w1.reshape(G, hg, DOUT_PAD, D_LAYERS)
    b1_g = b1.reshape(G, hg, 1, DOUT_PAD)

    return dict(
        res_w=jnp.stack(res_w),                        # (5, D, D)      f32
        res_b=jnp.stack(res_b),                        # (5, 1, D)      f32
        w0=w0_g.astype(jnp.bfloat16),                  # (G, D, hg*512) bf16
        b0a=b0a,                                       # (G, 2, hg*512) f32 (bias row 0, alpha row 1)
        w1=w1_g.astype(jnp.bfloat16),                  # (G, hg, 8, 512) bf16
        b1=b1_g,                                       # (G, hg, 1, 8)  f32
    )


# --------------------------- forward pass ---------------------------

def quaternion_net_forward(params, sensor_data, *, num_hydra_heads, training=False):
    B = sensor_data.shape[0]
    H = num_hydra_heads

    raw = quaternion_net_fused_pallas(sensor_data, params)          # (G, B, hg*8)
    G, _, w = raw.shape
    hg = w // DOUT_PAD
    per_head = jnp.transpose(raw.reshape(G, B, hg, DOUT_PAD),
                             (1, 0, 2, 3)).reshape(B, G * hg, DOUT_PAD)

    q_raw = jnp.transpose(per_head[:, :H, :4], (1, 0, 2))            # (H, B, 4)
    q_out = normalize_vecs(q_raw)
    c_raw = per_head[:, H, :3]                                       # covar head
    inv_vars = positive_fn(c_raw) + 1e-8

    eye3 = jnp.eye(3, dtype=jnp.float32)

    if training:
        q_cat = q_out.reshape(H * B, 4)                              # torch.cat(q_out, 0)
        inv_vars_rep = jnp.tile(inv_vars, (H, 1))
        Rinv = eye3[None] * inv_vars_rep[:, :, None]
        return q_cat, Rinv

    q_mean = normalize_vecs(set_quat_sign(q_out).mean(axis=0))       # (B, 4)
    Rinv_direct = eye3[None] * inv_vars[:, :, None]                  # (B, 3, 3), diagonal

    if H > 1:
        q_batch = jnp.transpose(q_out, (1, 0, 2)).reshape(-1, 4)     # (B*H, 4)
        q_batch_mean = jnp.tile(q_mean, (1, H)).reshape(-1, 4)
        phi_diff = quat_log_diff(q_batch, q_batch_mean).reshape(B, H, 3)
        # Rinv_direct is diagonal -> its inverse is the elementwise reciprocal; the outer
        # inverse uses the closed-form 3x3 adjugate (no batched LU).
        Rdir_inv = eye3[None] * (1.0 / inv_vars)[:, :, None]
        Rinv = _inv3x3(Rdir_inv + batch_sample_covariance(phi_diff))
    else:
        Rinv = Rinv_direct
    return q_mean, Rinv, Rinv_direct


# --------------------------- pure-JAX reference of the fused kernel (correctness check) ---------------------------

def _reference_heads(params, x):
    for i in range(NUM_RES_BLOCKS):
        x = jnp.maximum(x @ params["res_w"][i] + params["res_b"][i], 0.0) + x
    G, D, _ = params["w0"].shape
    hg = params["w1"].shape[1]
    w0 = params["w0"].astype(jnp.float32).reshape(G, D, hg, D_LAYERS)
    w0 = jnp.transpose(w0, (0, 2, 1, 3)).reshape(G * hg, D, D_LAYERS)
    b0 = params["b0a"][:, 0].reshape(G * hg, D_LAYERS)
    alpha = params["b0a"][:, 1].reshape(G * hg, D_LAYERS)
    w1 = params["w1"].astype(jnp.float32).reshape(G * hg, DOUT_PAD, D_LAYERS)
    b1 = params["b1"].reshape(G * hg, DOUT_PAD)
    outs = []
    for h in range(G * hg):
        h0 = x @ w0[h] + b0[h]
        h0 = jnp.where(h0 >= 0.0, h0, alpha[h] * h0)
        outs.append(h0 @ w1[h].T + b1[h])
    return jnp.stack(outs, axis=1)                                   # (B, G*hg, 8)


# --------------------------- demo ---------------------------

if __name__ == "__main__":
    B = 8                 # small demo batch; larger B amortizes the weight stream nearly for free
    D_IN_SENSOR = 32
    NUM_HEADS = 5         # module default is 25; the group chooser handles that too

    key = jax.random.PRNGKey(0)
    pkey, dkey = jax.random.split(key)
    params = init_params(pkey, D_IN_SENSOR, NUM_HEADS)
    sensor_data = jax.random.normal(dkey, (B, D_IN_SENSOR), jnp.float32)

    # kernel vs pure-JAX reference (bf16 activation casts -> loose tolerance)
    raw = quaternion_net_fused_pallas(sensor_data, params)
    jax.block_until_ready(raw)
    G, _, w = raw.shape
    hg = w // DOUT_PAD
    per_head = jnp.transpose(raw.reshape(G, B, hg, DOUT_PAD),
                             (1, 0, 2, 3)).reshape(B, G * hg, DOUT_PAD)
    ref = _reference_heads(params, sensor_data)
    max_err = float(jnp.max(jnp.abs(per_head - ref)))
    assert max_err < 0.1, f"kernel deviates from reference by {max_err}"

    # eval branch
    fwd = jax.jit(functools.partial(quaternion_net_forward,
                                    num_hydra_heads=NUM_HEADS, training=False))
    q_mean, Rinv, Rinv_direct = fwd(params, sensor_data)
    jax.block_until_ready((q_mean, Rinv, Rinv_direct))
    assert q_mean.shape == (B, 4)
    assert Rinv.shape == (B, 3, 3)
    assert Rinv_direct.shape == (B, 3, 3)
    assert bool(jnp.all(jnp.isfinite(q_mean))
                and jnp.all(jnp.isfinite(Rinv))
                and jnp.all(jnp.isfinite(Rinv_direct)))
    assert bool(jnp.allclose(jnp.linalg.norm(q_mean, axis=-1), 1.0, atol=1e-5))

    # training branch
    fwd_tr = jax.jit(functools.partial(quaternion_net_forward,
                                       num_hydra_heads=NUM_HEADS, training=True))
    q_cat, Rinv_tr = fwd_tr(params, sensor_data)
    jax.block_until_ready((q_cat, Rinv_tr))
    assert q_cat.shape == (NUM_HEADS * B, 4)
    assert Rinv_tr.shape == (NUM_HEADS * B, 3, 3)

    print("KERNEL_OK")
</pallas_src>

<mosaic_0001>
module attributes {stable_mosaic.version = 11 : i64} {
  func.func @_quatnet_head_group_kernel(%arg0: i32, %arg1: memref<8x32xf32, #tpu.memory_space<vmem>>, %arg2: memref<5x32x32xf32, #tpu.memory_space<vmem>>, %arg3: memref<5x1x32xf32, #tpu.memory_space<vmem>>, %arg4: memref<1x32x1536xbf16, #tpu.memory_space<vmem>>, %arg5: memref<1x2x1536xf32, #tpu.memory_space<vmem>>, %arg6: memref<1x3x8x512xbf16, #tpu.memory_space<vmem>>, %arg7: memref<1x3x1x8xf32, #tpu.memory_space<vmem>>, %arg8: memref<1x8x24xf32, #tpu.memory_space<vmem>>) attributes {dimension_semantics = [#tpu.dimension_semantics<parallel>], iteration_bounds = array<i64: 2>, scalar_prefetch = 0 : i64, scratch_operands = 0 : i64, tpu.core_type = #tpu.core_type<tc>, window_params = [{pipeline_mode = #tpu.pipeline_mode<synchronous>, transform_indices = @transform_0, window_bounds = array<i64: 8, 32>}, {pipeline_mode = #tpu.pipeline_mode<synchronous>, transform_indices = @transform_1, window_bounds = array<i64: 5, 32, 32>}, {pipeline_mode = #tpu.pipeline_mode<synchronous>, transform_indices = @transform_2, window_bounds = array<i64: 5, 1, 32>}, {transform_indices = @transform_3, window_bounds = array<i64: 1, 32, 1536>}, {transform_indices = @transform_4, window_bounds = array<i64: 1, 2, 1536>}, {transform_indices = @transform_5, window_bounds = array<i64: 1, 3, 8, 512>}, {transform_indices = @transform_6, window_bounds = array<i64: 1, 3, 1, 8>}, {transform_indices = @transform_7, window_bounds = array<i64: 1, 8, 24>}]} {
    %c0 = arith.constant 0 : index
    %c0_0 = arith.constant 0 : index
    %0 = vector.load %arg1[%c0, %c0_0] : memref<8x32xf32, #tpu.memory_space<vmem>>, vector<8x32xf32>
    %c0_1 = arith.constant 0 : index
    %c0_2 = arith.constant 0 : index
    %c0_3 = arith.constant 0 : index
    %1 = vector.load %arg2[%c0_1, %c0_2, %c0_3] : memref<5x32x32xf32, #tpu.memory_space<vmem>>, vector<1x32x32xf32>
    %2 = vector.shape_cast %1 : vector<1x32x32xf32> to vector<32x32xf32>
    %cst = arith.constant dense<0.000000e+00> : vector<8x32xf32>
    %3 = tpu.matmul %0, %2, %cst {dimension_numbers = #tpu.dot_dimension_numbers<[1], [0], [0], [1], [0, 0, 1, 1], [], []>} : vector<8x32xf32>, vector<32x32xf32>, vector<8x32xf32> -> vector<8x32xf32>
    %c0_4 = arith.constant 0 : index
    %c0_5 = arith.constant 0 : index
    %c0_6 = arith.constant 0 : index
    %4 = vector.load %arg3[%c0_4, %c0_5, %c0_6] : memref<5x1x32xf32, #tpu.memory_space<vmem>>, vector<1x1x32xf32>
    %5 = vector.shape_cast %4 : vector<1x1x32xf32> to vector<1x32xf32>
    %6 = vector.broadcast %5 : vector<1x32xf32> to vector<8x32xf32>
    %7 = arith.addf %3, %6 : vector<8x32xf32>
    %cst_7 = arith.constant 0.000000e+00 : f32
    %8 = vector.broadcast %cst_7 : f32 to vector<8x32xf32>
    %9 = arith.maximumf %7, %8 : vector<8x32xf32>
    %10 = arith.addf %9, %0 : vector<8x32xf32>
    %c1 = arith.constant 1 : index
    %c0_8 = arith.constant 0 : index
    %c0_9 = arith.constant 0 : index
    %11 = vector.load %arg2[%c1, %c0_8, %c0_9] : memref<5x32x32xf32, #tpu.memory_space<vmem>>, vector<1x32x32xf32>
    %12 = vector.shape_cast %11 : vector<1x32x32xf32> to vector<32x32xf32>
    %cst_10 = arith.constant dense<0.000000e+00> : vector<8x32xf32>
    %13 = tpu.matmul %10, %12, %cst_10 {dimension_numbers = #tpu.dot_dimension_numbers<[1], [0], [0], [1], [0, 0, 1, 1], [], []>} : vector<8x32xf32>, vector<32x32xf32>, vector<8x32xf32> -> vector<8x32xf32>
    %c1_11 = arith.constant 1 : index
    %c0_12 = arith.constant 0 : index
    %c0_13 = arith.constant 0 : index
    %14 = vector.load %arg3[%c1_11, %c0_12, %c0_13] : memref<5x1x32xf32, #tpu.memory_space<vmem>>, vector<1x1x32xf32>
    %15 = vector.shape_cast %14 : vector<1x1x32xf32> to vector<1x32xf32>
    %16 = vector.broadcast %15 : vector<1x32xf32> to vector<8x32xf32>
    %17 = arith.addf %13, %16 : vector<8x32xf32>
    %cst_14 = arith.constant 0.000000e+00 : f32
    %18 = vector.broadcast %cst_14 : f32 to vector<8x32xf32>
    %19 = arith.maximumf %17, %18 : vector<8x32xf32>
    %20 = arith.addf %19, %10 : vector<8x32xf32>
    %c2 = arith.constant 2 : index
    %c0_15 = arith.constant 0 : index
    %c0_16 = arith.constant 0 : index
    %21 = vector.load %arg2[%c2, %c0_15, %c0_16] : memref<5x32x32xf32, #tpu.memory_space<vmem>>, vector<1x32x32xf32>
    %22 = vector.shape_cast %21 : vector<1x32x32xf32> to vector<32x32xf32>
    %cst_17 = arith.constant dense<0.000000e+00> : vector<8x32xf32>
    %23 = tpu.matmul %20, %22, %cst_17 {dimension_numbers = #tpu.dot_dimension_numbers<[1], [0], [0], [1], [0, 0, 1, 1], [], []>} : vector<8x32xf32>, vector<32x32xf32>, vector<8x32xf32> -> vector<8x32xf32>
    %c2_18 = arith.constant 2 : index
    %c0_19 = arith.constant 0 : index
    %c0_20 = arith.constant 0 : index
    %24 = vector.load %arg3[%c2_18, %c0_19, %c0_20] : memref<5x1x32xf32, #tpu.memory_space<vmem>>, vector<1x1x32xf32>
    %25 = vector.shape_cast %24 : vector<1x1x32xf32> to vector<1x32xf32>
    %26 = vector.broadcast %25 : vector<1x32xf32> to vector<8x32xf32>
    %27 = arith.addf %23, %26 : vector<8x32xf32>
    %cst_21 = arith.constant 0.000000e+00 : f32
    %28 = vector.broadcast %cst_21 : f32 to vector<8x32xf32>
    %29 = arith.maximumf %27, %28 : vector<8x32xf32>
    %30 = arith.addf %29, %20 : vector<8x32xf32>
    %c3 = arith.constant 3 : index
    %c0_22 = arith.constant 0 : index
    %c0_23 = arith.constant 0 : index
    %31 = vector.load %arg2[%c3, %c0_22, %c0_23] : memref<5x32x32xf32, #tpu.memory_space<vmem>>, vector<1x32x32xf32>
    %32 = vector.shape_cast %31 : vector<1x32x32xf32> to vector<32x32xf32>
    %cst_24 = arith.constant dense<0.000000e+00> : vector<8x32xf32>
    %33 = tpu.matmul %30, %32, %cst_24 {dimension_numbers = #tpu.dot_dimension_numbers<[1], [0], [0], [1], [0, 0, 1, 1], [], []>} : vector<8x32xf32>, vector<32x32xf32>, vector<8x32xf32> -> vector<8x32xf32>
    %c3_25 = arith.constant 3 : index
    %c0_26 = arith.constant 0 : index
    %c0_27 = arith.constant 0 : index
    %34 = vector.load %arg3[%c3_25, %c0_26, %c0_27] : memref<5x1x32xf32, #tpu.memory_space<vmem>>, vector<1x1x32xf32>
    %35 = vector.shape_cast %34 : vector<1x1x32xf32> to vector<1x32xf32>
    %36 = vector.broadcast %35 : vector<1x32xf32> to vector<8x32xf32>
    %37 = arith.addf %33, %36 : vector<8x32xf32>
    %cst_28 = arith.constant 0.000000e+00 : f32
    %38 = vector.broadcast %cst_28 : f32 to vector<8x32xf32>
    %39 = arith.maximumf %37, %38 : vector<8x32xf32>
    %40 = arith.addf %39, %30 : vector<8x32xf32>
    %c4 = arith.constant 4 : index
    %c0_29 = arith.constant 0 : index
    %c0_30 = arith.constant 0 : index
    %41 = vector.load %arg2[%c4, %c0_29, %c0_30] : memref<5x32x32xf32, #tpu.memory_space<vmem>>, vector<1x32x32xf32>
    %42 = vector.shape_cast %41 : vector<1x32x32xf32> to vector<32x32xf32>
    %cst_31 = arith.constant dense<0.000000e+00> : vector<8x32xf32>
    %43 = tpu.matmul %40, %42, %cst_31 {dimension_numbers = #tpu.dot_dimension_numbers<[1], [0], [0], [1], [0, 0, 1, 1], [], []>} : vector<8x32xf32>, vector<32x32xf32>, vector<8x32xf32> -> vector<8x32xf32>
    %c4_32 = arith.constant 4 : index
    %c0_33 = arith.constant 0 : index
    %c0_34 = arith.constant 0 : index
    %44 = vector.load %arg3[%c4_32, %c0_33, %c0_34] : memref<5x1x32xf32, #tpu.memory_space<vmem>>, vector<1x1x32xf32>
    %45 = vector.shape_cast %44 : vector<1x1x32xf32> to vector<1x32xf32>
    %46 = vector.broadcast %45 : vector<1x32xf32> to vector<8x32xf32>
    %47 = arith.addf %43, %46 : vector<8x32xf32>
    %cst_35 = arith.constant 0.000000e+00 : f32
    %48 = vector.broadcast %cst_35 : f32 to vector<8x32xf32>
    %49 = arith.maximumf %47, %48 : vector<8x32xf32>
    %50 = arith.addf %49, %40 : vector<8x32xf32>
    %c0_36 = arith.constant 0 : index
    %c0_37 = arith.constant 0 : index
    %c0_38 = arith.constant 0 : index
    %51 = vector.load %arg5[%c0_36, %c0_37, %c0_38] : memref<1x2x1536xf32, #tpu.memory_space<vmem>>, vector<1x2x1536xf32>
    %52 = vector.shape_cast %51 : vector<1x2x1536xf32> to vector<2x1536xf32>
    %53 = arith.truncf %50 : vector<8x32xf32> to vector<8x32xbf16>
    %c0_39 = arith.constant 0 : index
    %c0_40 = arith.constant 0 : index
    %c0_41 = arith.constant 0 : index
    %54 = vector.load %arg4[%c0_39, %c0_40, %c0_41] : memref<1x32x1536xbf16, #tpu.memory_space<vmem>>, vector<1x32x1536xbf16>
    %55 = vector.shape_cast %54 : vector<1x32x1536xbf16> to vector<32x1536xbf16>
    %cst_42 = arith.constant dense<0.000000e+00> : vector<8x1536xf32>
    %56 = tpu.matmul %53, %55, %cst_42 {dimension_numbers = #tpu.dot_dimension_numbers<[1], [0], [0], [1], [0, 0, 1, 1], [], []>} : vector<8x32xbf16>, vector<32x1536xbf16>, vector<8x1536xf32> -> vector<8x1536xf32>
    %57 = vector.extract_strided_slice %52 {offsets = [0, 0], sizes = [1, 1536], strides = [1, 1]} : vector<2x1536xf32> to vector<1x1536xf32>
    %58 = vector.broadcast %57 : vector<1x1536xf32> to vector<8x1536xf32>
    %59 = arith.addf %56, %58 : vector<8x1536xf32>
    %cst_43 = arith.constant 0.000000e+00 : f32
    %60 = vector.broadcast %cst_43 : f32 to vector<8x1536xf32>
    %61 = arith.cmpf oge, %59, %60 : vector<8x1536xf32>
    %62 = vector.extract_strided_slice %52 {offsets = [1, 0], sizes = [1, 1536], strides = [1, 1]} : vector<2x1536xf32> to vector<1x1536xf32>
    %63 = vector.broadcast %62 : vector<1x1536xf32> to vector<8x1536xf32>
    %64 = arith.mulf %63, %59 : vector<8x1536xf32>
    %65 = arith.select %61, %59, %64 : vector<8x1536xi1>, vector<8x1536xf32>
    %c0_44 = arith.constant 0 : index
    %c0_45 = arith.constant 0 : index
    %c0_46 = arith.constant 0 : index
    %c0_47 = arith.constant 0 : index
    %66 = vector.load %arg6[%c0_44, %c0_45, %c0_46, %c0_47] : memref<1x3x8x512xbf16, #tpu.memory_space<vmem>>, vector<1x3x8x512xbf16>
    %67 = vector.shape_cast %66 : vector<1x3x8x512xbf16> to vector<3x8x512xbf16>
    %c0_48 = arith.constant 0 : index
    %c0_49 = arith.constant 0 : index
    %c0_50 = arith.constant 0 : index
    %c0_51 = arith.constant 0 : index
    %68 = vector.load %arg7[%c0_48, %c0_49, %c0_50, %c0_51] : memref<1x3x1x8xf32, #tpu.memory_space<vmem>>, vector<1x3x1x8xf32>
    %69 = vector.shape_cast %68 : vector<1x3x1x8xf32> to vector<3x1x8xf32>
    %70 = arith.truncf %65 : vector<8x1536xf32> to vector<8x1536xbf16>
    %71 = vector.extract_strided_slice %70 {offsets = [0, 0], sizes = [8, 512], strides = [1, 1]} : vector<8x1536xbf16> to vector<8x512xbf16>
    %72 = vector.extract_strided_slice %67 {offsets = [0, 0, 0], sizes = [1, 8, 512], strides = [1, 1, 1]} : vector<3x8x512xbf16> to vector<1x8x512xbf16>
    %73 = vector.shape_cast %72 : vector<1x8x512xbf16> to vector<8x512xbf16>
    %cst_52 = arith.constant dense<0.000000e+00> : vector<8x8xf32>
    %74 = tpu.matmul %71, %73, %cst_52 {dimension_numbers = #tpu.dot_dimension_numbers<[1], [1], [0], [0], [0, 0, 1, 0], [], []>} : vector<8x512xbf16>, vector<8x512xbf16>, vector<8x8xf32> -> vector<8x8xf32>
    %75 = vector.extract_strided_slice %69 {offsets = [0, 0, 0], sizes = [1, 1, 8], strides = [1, 1, 1]} : vector<3x1x8xf32> to vector<1x1x8xf32>
    %76 = vector.shape_cast %75 : vector<1x1x8xf32> to vector<1x8xf32>
    %77 = vector.broadcast %76 : vector<1x8xf32> to vector<8x8xf32>
    %78 = arith.addf %74, %77 : vector<8x8xf32>
    %79 = vector.extract_strided_slice %70 {offsets = [0, 512], sizes = [8, 512], strides = [1, 1]} : vector<8x1536xbf16> to vector<8x512xbf16>
    %80 = vector.extract_strided_slice %67 {offsets = [1, 0, 0], sizes = [1, 8, 512], strides = [1, 1, 1]} : vector<3x8x512xbf16> to vector<1x8x512xbf16>
    %81 = vector.shape_cast %80 : vector<1x8x512xbf16> to vector<8x512xbf16>
    %cst_53 = arith.constant dense<0.000000e+00> : vector<8x8xf32>
    %82 = tpu.matmul %79, %81, %cst_53 {dimension_numbers = #tpu.dot_dimension_numbers<[1], [1], [0], [0], [0, 0, 1, 0], [], []>} : vector<8x512xbf16>, vector<8x512xbf16>, vector<8x8xf32> -> vector<8x8xf32>
    %83 = vector.extract_strided_slice %69 {offsets = [1, 0, 0], sizes = [1, 1, 8], strides = [1, 1, 1]} : vector<3x1x8xf32> to vector<1x1x8xf32>
    %84 = vector.shape_cast %83 : vector<1x1x8xf32> to vector<1x8xf32>
    %85 = vector.broadcast %84 : vector<1x8xf32> to vector<8x8xf32>
    %86 = arith.addf %82, %85 : vector<8x8xf32>
    %87 = vector.extract_strided_slice %70 {offsets = [0, 1024], sizes = [8, 512], strides = [1, 1]} : vector<8x1536xbf16> to vector<8x512xbf16>
    %88 = vector.extract_strided_slice %67 {offsets = [2, 0, 0], sizes = [1, 8, 512], strides = [1, 1, 1]} : vector<3x8x512xbf16> to vector<1x8x512xbf16>
    %89 = vector.shape_cast %88 : vector<1x8x512xbf16> to vector<8x512xbf16>
    %cst_54 = arith.constant dense<0.000000e+00> : vector<8x8xf32>
    %90 = tpu.matmul %87, %89, %cst_54 {dimension_numbers = #tpu.dot_dimension_numbers<[1], [1], [0], [0], [0, 0, 1, 0], [], []>} : vector<8x512xbf16>, vector<8x512xbf16>, vector<8x8xf32> -> vector<8x8xf32>
    %91 = vector.extract_strided_slice %69 {offsets = [2, 0, 0], sizes = [1, 1, 8], strides = [1, 1, 1]} : vector<3x1x8xf32> to vector<1x1x8xf32>
    %92 = vector.shape_cast %91 : vector<1x1x8xf32> to vector<1x8xf32>
    %93 = vector.broadcast %92 : vector<1x8xf32> to vector<8x8xf32>
    %94 = arith.addf %90, %93 : vector<8x8xf32>
    %95 = tpu.concatenate %78, %86, %94 in 1 : vector<8x8xf32>, vector<8x8xf32>, vector<8x8xf32> -> vector<8x24xf32>
    %96 = vector.shape_cast %95 : vector<8x24xf32> to vector<1x8x24xf32>
    %c0_55 = arith.constant 0 : index
    %c0_56 = arith.constant 0 : index
    %c0_57 = arith.constant 0 : index
    %97 = vector.load %arg8[%c0_55, %c0_56, %c0_57] : memref<1x8x24xf32, #tpu.memory_space<vmem>>, vector<1x8x24xf32>
    tpu.vector_store %arg8[%c0_55, %c0_56, %c0_57], %96 {strides = array<i32>} : memref<1x8x24xf32, #tpu.memory_space<vmem>>, vector<1x8x24xf32>,
    return
  }
  func.func @transform_0(%arg0: i32) -> (i32, i32) {
    %c0_i32 = arith.constant 0 : i32
    %c0_i32_0 = arith.constant 0 : i32
    %c0_i32_1 = arith.constant 0 : i32
    return %c0_i32, %c0_i32_0 : i32, i32
  }
  func.func @transform_1(%arg0: i32) -> (i32, i32, i32) {
    %c0_i32 = arith.constant 0 : i32
    %c0_i32_0 = arith.constant 0 : i32
    %c0_i32_1 = arith.constant 0 : i32
    %c0_i32_2 = arith.constant 0 : i32
    return %c0_i32, %c0_i32_0, %c0_i32_1 : i32, i32, i32
  }
  func.func @transform_2(%arg0: i32) -> (i32, i32, i32) {
    %c0_i32 = arith.constant 0 : i32
    %c0_i32_0 = arith.constant 0 : i32
    %c0_i32_1 = arith.constant 0 : i32
    %c0_i32_2 = arith.constant 0 : i32
    return %c0_i32, %c0_i32_0, %c0_i32_1 : i32, i32, i32
  }
  func.func @transform_3(%arg0: i32) -> (i32, i32, i32) {
    %c0_i32 = arith.constant 0 : i32
    %c0_i32_0 = arith.constant 0 : i32
    %c0_i32_1 = arith.constant 0 : i32
    return %arg0, %c0_i32, %c0_i32_0 : i32, i32, i32
  }
  func.func @transform_4(%arg0: i32) -> (i32, i32, i32) {
    %c0_i32 = arith.constant 0 : i32
    %c0_i32_0 = arith.constant 0 : i32
    %c0_i32_1 = arith.constant 0 : i32
    return %arg0, %c0_i32, %c0_i32_0 : i32, i32, i32
  }
  func.func @transform_5(%arg0: i32) -> (i32, i32, i32, i32) {
    %c0_i32 = arith.constant 0 : i32
    %c0_i32_0 = arith.constant 0 : i32
    %c0_i32_1 = arith.constant 0 : i32
    %c0_i32_2 = arith.constant 0 : i32
    return %arg0, %c0_i32, %c0_i32_0, %c0_i32_1 : i32, i32, i32, i32
  }
  func.func @transform_6(%arg0: i32) -> (i32, i32, i32, i32) {
    %c0_i32 = arith.constant 0 : i32
    %c0_i32_0 = arith.constant 0 : i32
    %c0_i32_1 = arith.constant 0 : i32
    %c0_i32_2 = arith.constant 0 : i32
    return %arg0, %c0_i32, %c0_i32_0, %c0_i32_1 : i32, i32, i32, i32
  }
  func.func @transform_7(%arg0: i32) -> (i32, i32, i32) {
    %c0_i32 = arith.constant 0 : i32
    %c0_i32_0 = arith.constant 0 : i32
    %c0_i32_1 = arith.constant 0 : i32
    return %arg0, %c0_i32, %c0_i32_0 : i32, i32, i32
  }
}

</mosaic_0001>

<llo_original>
// kernel: tpu_custom_call.1
$region0: #{tpu_custom_call.1}
  #allocation0 [shape = 'u32[]', space=smem, size = 0x4, offset = 0x4, fixed_abs, tag = 'smem constant byte address 0x4 - core index']
  #allocation1 [shape = 'u32[144,128]{1,0:T(1,128)}', space=vmem, size = 0x12000, scoped, tag = 'internal scratch']
  %s0 = inlined_call_operand.hbm [shape: f32[8,32], index: 0, kind: input, shape index: {}]
  %s1 = inlined_call_operand.hbm [shape: f32[5,32,32], index: 1, kind: input, shape index: {}]
  %s2 = inlined_call_operand.vmem [shape: f32[5,1,32], index: 2, kind: input, shape index: {}]
  %s3 = inlined_call_operand.hbm [shape: bf16[2,32,1536], index: 3, kind: input, shape index: {}]
  %s4 = inlined_call_operand.hbm [shape: f32[2,2,1536], index: 4, kind: input, shape index: {}]
  %s5 = inlined_call_operand.hbm [shape: bf16[2,3,8,512], index: 5, kind: input, shape index: {}]
  %s6 = inlined_call_operand.vmem [shape: f32[2,3,1,8], index: 6, kind: input, shape index: {}]
  %s7 = inlined_call_operand.hbm [shape: f32[2,8,24], index: 7, kind: output, shape index: {}]
  %s8 = sld [smem:[#allocation0]]
  $region81: #{tpu_custom_call.1} parent=0
    _
  %s10 = ssub.s32 1, %s8
  %s11 = scalar_select 0, %s10, %s8
  $region1: #{tpu_custom_call.1} parent=0
    #allocation2 [shape = 'u8[4096]{0}', space=vmem, size = 0x1000, scoped, tag = 'input window, operand 0, single buffered']
    #allocation3 [shape = 's32[2]{0}', space=sflag, size = 0x8, scoped, tag = 'scoped memory for tpu_custom_call.1']
    #allocation4 [shape = 's32[2]{0}', space=sflag, size = 0x8, scoped, tag = 'scoped memory for tpu_custom_call.1']
    #allocation5 [shape = 'u8[81920]{0}', space=vmem, size = 0x14000, scoped, tag = 'input window, operand 1, single buffered']
    #allocation6 [shape = 's32[1]{0}', space=sflag, size = 0x4, scoped, tag = 'scoped memory for tpu_custom_call.1']
    #allocation7 [shape = 'u8[196608]{0}', space=vmem, size = 0x30000, scoped, tag = 'input window, operand 3']
    #allocation8 [shape = 'u8[24576]{0}', space=vmem, size = 0x6000, scoped, tag = 'input window, operand 4']
    #allocation9 [shape = 'u8[49152]{0}', space=vmem, size = 0xc000, scoped, tag = 'input window, operand 5']
    #allocation10 [shape = 'u8[8192]{0}', space=vmem, size = 0x2000, scoped, tag = 'output window, operand 0']
    %12 = vsyncpa [#allocation3], 0
    %13 = vsyncpa [#allocation6], 0
    %14 = vsyncpa [#allocation4], 0
    %s15 = scalar_lea.sflag [#allocation4], 1
    %16 = vsyncpa %s15, 0
    loop: start=0, step=1, limit=4
    $region2: #{tpu_custom_call.1} parent=1 // loop_pre_header
      _
    $region3: #{tpu_custom_call.1} parent=1 // loop_header
      %s18 = sphi 0, %s22
      %p19 = scmp.ge.s32.totalorder %s18, 4
      %s26 = sphi 0, %s26
      %s28 = sphi 0, %s26
      %s29 = sphi 0, %s28
      %s43 = sphi 0, %s29
      %s47 = sphi 0, %s47
      %s49 = sphi 0, %s47
      %s50 = sphi 0, %s49
      %s64 = sphi 0, %s50
      %s68 = sphi 0, %s68
      %s70 = sphi 0, %s68
      %s71 = sphi 0, %s70
      %s85 = sphi 0, %s71
      %s91 = sphi 0, %s93
      %s94 = sphi 0, %s91
      %s95 = sphi 0, %s94
      %s111 = sphi 0, %s95
      %s117 = sphi 0, %s119
      %s120 = sphi 0, %s117
      %s121 = sphi 0, %s120
      %s137 = sphi 0, %s121
      %s143 = sphi 0, %s145
      %s146 = sphi 0, %s143
      %s147 = sphi 0, %s146
      %s163 = sphi 0, %s147
      %s169 = sphi 0, %s171
      %s172 = sphi 0, %s169
      %s173 = sphi 0, %s172
      %s189 = sphi 0, %s173
      %s195 = sphi 0, %s197
      %s198 = sphi 0, %s195
      %s199 = sphi 0, %s198
      %s215 = sphi 0, %s199
    $region4: #{tpu_custom_call.1} parent=1 // loop_header_branch
      %21 = sbr.rel (%p19) target = $region8
    $region5: #{tpu_custom_call.1} parent=1 // loop_body
      %s23 = ssub.s32 %s18, 1
      %s24 = ssub.s32 %s18, 2
      %s25 = sadd.s32 %s18, 1
      %s27 = sadd.s32 %s26, 1
      %p30 = scmp.eq.s32.totalorder %s18, 1
      %p31 = scmp.ne.s32.totalorder %s26, %s28
      %p32 = scmp.eq.s32.totalorder %s18, 0
      %p33 = por %p31, %p32
      %p34 = scmp.ne.s32.totalorder %s26, %s28
      %p35 = scmp.eq.s32.totalorder %s23, 1
      %p36 = por %p34, %p35
      %p37 = scmp.ne.s32.totalorder %s28, %s29
      %p38 = scmp.eq.s32.totalorder %s23, 0
      %p39 = por %p37, %p38
      %p40 = scmp.ne.s32.totalorder %s28, %s29
      %p41 = scmp.eq.s32.totalorder %s24, 1
      %p42 = por %p40, %p41
      %p44 = scmp.ne.s32.totalorder %s29, %s43
      %p45 = scmp.eq.s32.totalorder %s24, 0
      %p46 = por %p44, %p45
      %s48 = sadd.s32 %s47, 1
      %p51 = scmp.eq.s32.totalorder %s18, 1
      %p52 = scmp.ne.s32.totalorder %s47, %s49
      %p53 = scmp.eq.s32.totalorder %s18, 0
      %p54 = por %p52, %p53
      %p55 = scmp.ne.s32.totalorder %s47, %s49
      %p56 = scmp.eq.s32.totalorder %s23, 1
      %p57 = por %p55, %p56
      %p58 = scmp.ne.s32.totalorder %s49, %s50
      %p59 = scmp.eq.s32.totalorder %s23, 0
      %p60 = por %p58, %p59
      %p61 = scmp.ne.s32.totalorder %s49, %s50
      %p62 = scmp.eq.s32.totalorder %s24, 1
      %p63 = por %p61, %p62
      %p65 = scmp.ne.s32.totalorder %s50, %s64
      %p66 = scmp.eq.s32.totalorder %s24, 0
      %p67 = por %p65, %p66
      %s69 = sadd.s32 %s68, 1
      %p72 = scmp.eq.s32.totalorder %s18, 1
      %p73 = scmp.ne.s32.totalorder %s68, %s70
      %p74 = scmp.eq.s32.totalorder %s18, 0
      %p75 = por %p73, %p74
      %p76 = scmp.ne.s32.totalorder %s68, %s70
      %p77 = scmp.eq.s32.totalorder %s23, 1
      %p78 = por %p76, %p77
      %p79 = scmp.ne.s32.totalorder %s70, %s71
      %p80 = scmp.eq.s32.totalorder %s23, 0
      %p81 = por %p79, %p80
      %p82 = scmp.ne.s32.totalorder %s70, %s71
      %p83 = scmp.eq.s32.totalorder %s24, 1
      %p84 = por %p82, %p83
      %p86 = scmp.ne.s32.totalorder %s71, %s85
      %p87 = scmp.eq.s32.totalorder %s24, 0
      %p88 = por %p86, %p87
      %s89 = ssub.s32 %s18, %s25
      %p90 = scmp.eq.s32.totalorder %s89, 0
      %s92 = sadd.s32 %s91, 1
      %s93 = scalar_select %p90, %s91, %s92
      %p96 = pneg %p90
      %p97 = scmp.eq.s32.totalorder %s18, 1
      %p98 = por %p96, %p97
      %p99 = scmp.ne.s32.totalorder %s91, %s94
      %p100 = scmp.eq.s32.totalorder %s18, 0
      %p101 = por %p99, %p100
      %p102 = scmp.ne.s32.totalorder %s91, %s94
      %p103 = scmp.eq.s32.totalorder %s23, 1
      %p104 = por %p102, %p103
      %p105 = scmp.ne.s32.totalorder %s94, %s95
      %p106 = scmp.eq.s32.totalorder %s23, 0
      %p107 = por %p105, %p106
      %p108 = scmp.ne.s32.totalorder %s94, %s95
      %p109 = scmp.eq.s32.totalorder %s24, 1
      %p110 = por %p108, %p109
      %p112 = scmp.ne.s32.totalorder %s95, %s111
      %p113 = scmp.eq.s32.totalorder %s24, 0
      %p114 = por %p112, %p113
      %s115 = ssub.s32 %s18, %s25
      %p116 = scmp.eq.s32.totalorder %s115, 0
      %s118 = sadd.s32 %s117, 1
      %s119 = scalar_select %p116, %s117, %s118
      %p122 = pneg %p116
      %p123 = scmp.eq.s32.totalorder %s18, 1
      %p124 = por %p122, %p123
      %p125 = scmp.ne.s32.totalorder %s117, %s120
      %p126 = scmp.eq.s32.totalorder %s18, 0
      %p127 = por %p125, %p126
      %p128 = scmp.ne.s32.totalorder %s117, %s120
      %p129 = scmp.eq.s32.totalorder %s23, 1
      %p130 = por %p128, %p129
      %p131 = scmp.ne.s32.totalorder %s120, %s121
      %p132 = scmp.eq.s32.totalorder %s23, 0
      %p133 = por %p131, %p132
      %p134 = scmp.ne.s32.totalorder %s120, %s121
      %p135 = scmp.eq.s32.totalorder %s24, 1
      %p136 = por %p134, %p135
      %p138 = scmp.ne.s32.totalorder %s121, %s137
      %p139 = scmp.eq.s32.totalorder %s24, 0
      %p140 = por %p138, %p139
      %s141 = ssub.s32 %s18, %s25
      %p142 = scmp.eq.s32.totalorder %s141, 0
      %s144 = sadd.s32 %s143, 1
      %s145 = scalar_select %p142, %s143, %s144
      %p148 = pneg %p142
      %p149 = scmp.eq.s32.totalorder %s18, 1
      %p150 = por %p148, %p149
      %p151 = scmp.ne.s32.totalorder %s143, %s146
      %p152 = scmp.eq.s32.totalorder %s18, 0
      %p153 = por %p151, %p152
      %p154 = scmp.ne.s32.totalorder %s143, %s146
      %p155 = scmp.eq.s32.totalorder %s23, 1
      %p156 = por %p154, %p155
      %p157 = scmp.ne.s32.totalorder %s146, %s147
      %p158 = scmp.eq.s32.totalorder %s23, 0
      %p159 = por %p157, %p158
      %p160 = scmp.ne.s32.totalorder %s146, %s147
      %p161 = scmp.eq.s32.totalorder %s24, 1
      %p162 = por %p160, %p161
      %p164 = scmp.ne.s32.totalorder %s147, %s163
      %p165 = scmp.eq.s32.totalorder %s24, 0
      %p166 = por %p164, %p165
      %s167 = ssub.s32 %s18, %s25
      %p168 = scmp.eq.s32.totalorder %s167, 0
      %s170 = sadd.s32 %s169, 1
      %s171 = scalar_select %p168, %s169, %s170
      %p174 = pneg %p168
      %p175 = scmp.eq.s32.totalorder %s18, 1
      %p176 = por %p174, %p175
      %p177 = scmp.ne.s32.totalorder %s169, %s172
      %p178 = scmp.eq.s32.totalorder %s18, 0
      %p179 = por %p177, %p178
      %p180 = scmp.ne.s32.totalorder %s169, %s172
      %p181 = scmp.eq.s32.totalorder %s23, 1
      %p182 = por %p180, %p181
      %p183 = scmp.ne.s32.totalorder %s172, %s173
      %p184 = scmp.eq.s32.totalorder %s23, 0
      %p185 = por %p183, %p184
      %p186 = scmp.ne.s32.totalorder %s172, %s173
      %p187 = scmp.eq.s32.totalorder %s24, 1
      %p188 = por %p186, %p187
      %p190 = scmp.ne.s32.totalorder %s173, %s189
      %p191 = scmp.eq.s32.totalorder %s24, 0
      %p192 = por %p190, %p191
      %s193 = ssub.s32 %s18, %s25
      %p194 = scmp.eq.s32.totalorder %s193, 0
      %s196 = sadd.s32 %s195, 1
      %s197 = scalar_select %p194, %s195, %s196
      %p200 = pneg %p194
      %p201 = scmp.eq.s32.totalorder %s18, 1
      %p202 = por %p200, %p201
      %p203 = scmp.ne.s32.totalorder %s195, %s198
      %p204 = scmp.eq.s32.totalorder %s18, 0
      %p205 = por %p203, %p204
      %p206 = scmp.ne.s32.totalorder %s195, %s198
      %p207 = scmp.eq.s32.totalorder %s23, 1
      %p208 = por %p206, %p207
      %p209 = scmp.ne.s32.totalorder %s198, %s199
      %p210 = scmp.eq.s32.totalorder %s23, 0
      %p211 = por %p209, %p210
      %p212 = scmp.ne.s32.totalorder %s198, %s199
      %p213 = scmp.eq.s32.totalorder %s24, 1
      %p214 = por %p212, %p213
      %p216 = scmp.ne.s32.totalorder %s199, %s215
      %p217 = scmp.eq.s32.totalorder %s24, 0
      %p218 = por %p216, %p217
      %p219 = scmp.le.s32.totalorder 1, %s18
      %p220 = scmp.lt.s32.totalorder %s18, 3
      %p221 = pnand %p219, %p220
      %p222 = pneg %p221
      // Predicated region
      $region9: #{tpu_custom_call.1} parent=5 // pred_check
        _
      $region10: #{tpu_custom_call.1} parent=5 // pred_check_branch
        %224 = sbr.rel (%p221) target = $region12
      $region11: #{tpu_custom_call.1} parent=5 // pred_region
        %s225 = ssub.s32 %s18, 1
        // Predicated region
        $region13: #{tpu_custom_call.1} parent=11 // pred_check
          %p226 = pneg %p39
        $region14: #{tpu_custom_call.1} parent=11 // pred_check_branch
          %228 = sbr.rel (%p226) target = $region16
        $region15: #{tpu_custom_call.1} parent=11 // pred_region
          %s230 = ssub.s32 128, 128
          %231 = vsyncadd [#allocation3], %s230
          %s233 = sshll.u32 [#allocation2], 4
          %s234 = int_to_ptr.vmem [resolvable:$true] %s233
          %236 = dma.hbm_to_vmem [thread:$0]  %s0, 128, %s234, [#allocation3]
        $region16: #{tpu_custom_call.1} parent=11 // pred_fallthru
          _
        // Predicated region
        $region17: #{tpu_custom_call.1} parent=11 // pred_check
          %p237 = pneg %p60
        $region18: #{tpu_custom_call.1} parent=11 // pred_check_branch
          %239 = sbr.rel (%p237) target = $region20
        $region19: #{tpu_custom_call.1} parent=11 // pred_region
          %s241 = ssub.s32 2560, 2560
          %242 = vsyncadd [#allocation6], %s241
          %s243 = sshll.u32 [#allocation5], 4
          %s244 = int_to_ptr.vmem [resolvable:$true] %s243
          %249 = dma.hbm_to_vmem [thread:$0]  %s1, 2560, %s244, [#allocation6], 128, 128, 8
        $region20: #{tpu_custom_call.1} parent=11 // pred_fallthru
          _
        // Predicated region
        $region21: #{tpu_custom_call.1} parent=11 // pred_check
          %p250 = pneg %p81
        $region22: #{tpu_custom_call.1} parent=11 // pred_check_branch
          %252 = sbr.rel (%p250) target = $region24
        $region23: #{tpu_custom_call.1} parent=11 // pred_region
          _
        $region24: #{tpu_custom_call.1} parent=11 // pred_fallthru
          _
      $region12: #{tpu_custom_call.1} parent=5 // pred_fallthru
        _
      %p253 = scmp.lt.s32.totalorder %s18, 2
      // Predicated region
      $region25: #{tpu_custom_call.1} parent=5 // pred_check
        %p254 = pneg %p253
      $region26: #{tpu_custom_call.1} parent=5 // pred_check_branch
        %256 = sbr.rel (%p254) target = $region28
      $region27: #{tpu_custom_call.1} parent=5 // pred_region
        // Predicated region
        $region29: #{tpu_custom_call.1} parent=27 // pred_check
          %p257 = pneg %p101
        $region30: #{tpu_custom_call.1} parent=27 // pred_check_branch
          %259 = sbr.rel (%p257) target = $region32
        $region31: #{tpu_custom_call.1} parent=27 // pred_region
          %s260 = sand.u32 %s18, 1
          %s261 = scalar_lea.sflag [#allocation3], %s260
          %s262 = sand.u32 %s91, 1
          %s263 = smul.addr %s262, 192
          %s264 = scalar_lea.vmem [#allocation7], %s263
          %s266 = ssub.s32 3072, 3072
          %267 = vsyncadd %s261, %s266
          %s268 = smul.addr %s18, 48
          %s269 = smul.addr %s268, 64
          %s270 = scalar_lea.hbm %s3, %s269
          %s271 = sshll.u32 %s264, 4
          %s272 = int_to_ptr.vmem [resolvable:$true] %s271
          %277 = dma.hbm_to_vmem [thread:$0]  %s270, 3072, %s272, %s261, 768, 768, 48
        $region32: #{tpu_custom_call.1} parent=27 // pred_fallthru
          _
        // Predicated region
        $region33: #{tpu_custom_call.1} parent=27 // pred_check
          %p278 = pneg %p127
        $region34: #{tpu_custom_call.1} parent=27 // pred_check_branch
          %280 = sbr.rel (%p278) target = $region36
        $region35: #{tpu_custom_call.1} parent=27 // pred_region
          %s281 = sand.u32 %s18, 1
          %s282 = scalar_lea.sflag [#allocation3], %s281
          %s283 = sand.u32 %s117, 1
          %s284 = smul.addr %s283, 24
          %s285 = scalar_lea.vmem [#allocation8], %s284
          %s287 = ssub.s32 384, 384
          %288 = vsyncadd %s282, %s287
          %s289 = smul.addr %s18, 12
          %s290 = smul.addr %s289, 32
          %s291 = scalar_lea.hbm %s4, %s290
          %s293 = sshll.u32 %s285, 4
          %s294 = int_to_ptr.vmem [resolvable:$true] %s293
          %296 = dma.hbm_to_vmem [thread:$0]  %s291, 384, %s294, %s282
        $region36: #{tpu_custom_call.1} parent=27 // pred_fallthru
          _
        // Predicated region
        $region37: #{tpu_custom_call.1} parent=27 // pred_check
          %p297 = pneg %p153
        $region38: #{tpu_custom_call.1} parent=27 // pred_check_branch
          %299 = sbr.rel (%p297) target = $region40
        $region39: #{tpu_custom_call.1} parent=27 // pred_region
          %s300 = sand.u32 %s18, 1
          %s301 = scalar_lea.sflag [#allocation3], %s300
          %s302 = sand.u32 %s143, 1
          %s303 = smul.addr %s302, 48
          %s304 = scalar_lea.vmem [#allocation9], %s303
          %s306 = ssub.s32 768, 768
          %307 = vsyncadd %s301, %s306
          %s308 = smul.addr %s18, 12
          %s309 = smul.addr %s308, 64
          %s310 = scalar_lea.hbm %s5, %s309
          %s311 = sshll.u32 %s304, 4
          %s312 = int_to_ptr.vmem [resolvable:$true] %s311
          %317 = dma.hbm_to_vmem [thread:$0]  %s310, 768, %s312, %s301, 256, 256, 16
        $region40: #{tpu_custom_call.1} parent=27 // pred_fallthru
          _
        // Predicated region
        $region41: #{tpu_custom_call.1} parent=27 // pred_check
          %p318 = pneg %p179
        $region42: #{tpu_custom_call.1} parent=27 // pred_check_branch
          %320 = sbr.rel (%p318) target = $region44
        $region43: #{tpu_custom_call.1} parent=27 // pred_region
          %p321 = scmp.lt.s32.totalorder %s18, 1
          %s322 = scalar_select %p321, %s18, 1
          %s323 = smul.addr %s322, 3
          %s324 = scalar_lea.vmem %s6, %s323
        $region44: #{tpu_custom_call.1} parent=27 // pred_fallthru
          _
      $region28: #{tpu_custom_call.1} parent=5 // pred_fallthru
        _
      %p325 = scmp.le.s32.totalorder 1, %s18
      %p326 = scmp.lt.s32.totalorder %s18, 3
      %p327 = pnand %p325, %p326
      %p328 = pneg %p327
      // Predicated region
      $region45: #{tpu_custom_call.1} parent=5 // pred_check
        _
      $region46: #{tpu_custom_call.1} parent=5 // pred_check_branch
        %330 = sbr.rel (%p327) target = $region48
      $region47: #{tpu_custom_call.1} parent=5 // pred_region
        %s331 = ssub.s32 %s18, 1
        // Predicated region
        $region49: #{tpu_custom_call.1} parent=47 // pred_check
          %p332 = pneg %p39
        $region50: #{tpu_custom_call.1} parent=47 // pred_check_branch
          %334 = sbr.rel (%p332) target = $region52
        $region51: #{tpu_custom_call.1} parent=47 // pred_region
          %335 = dma.done [#allocation3], 128
        $region52: #{tpu_custom_call.1} parent=47 // pred_fallthru
          _
        // Predicated region
        $region53: #{tpu_custom_call.1} parent=47 // pred_check
          %p336 = pneg %p60
        $region54: #{tpu_custom_call.1} parent=47 // pred_check_branch
          %338 = sbr.rel (%p336) target = $region56
        $region55: #{tpu_custom_call.1} parent=47 // pred_region
          %339 = dma.done [#allocation6], 2560
        $region56: #{tpu_custom_call.1} parent=47 // pred_fallthru
          _
        %s340 = sand.u32 %s23, 1
        %s341 = scalar_lea.sflag [#allocation3], %s340
        %s342 = sand.u32 %s94, 1
        %s343 = smul.addr %s342, 192
        %s344 = scalar_lea.vmem [#allocation7], %s343
        // Predicated region
        $region57: #{tpu_custom_call.1} parent=47 // pred_check
          %p345 = pneg %p107
        $region58: #{tpu_custom_call.1} parent=47 // pred_check_branch
          %347 = sbr.rel (%p345) target = $region60
        $region59: #{tpu_custom_call.1} parent=47 // pred_region
          %348 = dma.done %s341, 3072
        $region60: #{tpu_custom_call.1} parent=47 // pred_fallthru
          _
        %s349 = sand.u32 %s23, 1
        %s350 = scalar_lea.sflag [#allocation3], %s349
        %s351 = sand.u32 %s120, 1
        %s352 = smul.addr %s351, 24
        %s353 = scalar_lea.vmem [#allocation8], %s352
        // Predicated region
        $region61: #{tpu_custom_call.1} parent=47 // pred_check
          %p354 = pneg %p133
        $region62: #{tpu_custom_call.1} parent=47 // pred_check_branch
          %356 = sbr.rel (%p354) target = $region64
        $region63: #{tpu_custom_call.1} parent=47 // pred_region
          %357 = dma.done %s350, 384
        $region64: #{tpu_custom_call.1} parent=47 // pred_fallthru
          _
        %s358 = sand.u32 %s23, 1
        %s359 = scalar_lea.sflag [#allocation3], %s358
        %s360 = sand.u32 %s146, 1
        %s361 = smul.addr %s360, 48
        %s362 = scalar_lea.vmem [#allocation9], %s361
        // Predicated region
        $region65: #{tpu_custom_call.1} parent=47 // pred_check
          %p363 = pneg %p159
        $region66: #{tpu_custom_call.1} parent=47 // pred_check_branch
          %365 = sbr.rel (%p363) target = $region68
        $region67: #{tpu_custom_call.1} parent=47 // pred_region
          %366 = dma.done %s359, 768
        $region68: #{tpu_custom_call.1} parent=47 // pred_fallthru
          _
        %p367 = pneg %p39
        %p368 = pneg %p36
        %p369 = pneg %p60
        %p370 = pneg %p57
        %p371 = pneg %p81
        %p372 = pneg %p78
        %s373 = sand.u32 %s23, 1
        %s374 = scalar_lea.sflag [#allocation3], %s373
        %s375 = sand.u32 %s94, 1
        %s376 = smul.addr %s375, 192
        %s377 = scalar_lea.vmem [#allocation7], %s376
        %p378 = pneg %p107
        %p379 = pneg %p104
        %s380 = sand.u32 %s23, 1
        %s381 = scalar_lea.sflag [#allocation3], %s380
        %s382 = sand.u32 %s120, 1
        %s383 = smul.addr %s382, 24
        %s384 = scalar_lea.vmem [#allocation8], %s383
        %p385 = pneg %p133
        %p386 = pneg %p130
        %s387 = sand.u32 %s23, 1
        %s388 = scalar_lea.sflag [#allocation3], %s387
        %s389 = sand.u32 %s146, 1
        %s390 = smul.addr %s389, 48
        %s391 = scalar_lea.vmem [#allocation9], %s390
        %p392 = pneg %p159
        %p393 = pneg %p156
        %p394 = scmp.lt.s32.totalorder %s23, 1
        %s395 = scalar_select %p394, %s23, 1
        %s396 = smul.addr %s395, 3
        %s397 = scalar_lea.vmem %s6, %s396
        %p398 = pneg %p185
        %p399 = pneg %p182
        %p400 = pneg %p211
        %p401 = pneg %p208
        %s402 = sand.u32 %s198, 1
        %s403 = scalar_lea.sflag [#allocation4], %s402
        %s404 = sand.u32 %s198, 1
        %s405 = smul.addr %s404, 8
        %s406 = scalar_lea.vmem [#allocation10], %s405
        %p407 = scmp.lt.s32.totalorder %s23, 1
        %s408 = scalar_select %p407, %s23, 1
        %s409 = smul.addr %s408, 3
        %s410 = scalar_lea.vmem %s6, %s409
        %v412 = vld [vmem:[#allocation2] sm:$0xff]
        %v413 = vld [vmem:[#allocation5] sm:$0xff]
        %v414 = vld [vmem:[#allocation5 + $0x8] sm:$0xff]
        %v415 = vld [vmem:[#allocation5 + $0x10] sm:$0xff]
        %v416 = vld [vmem:[#allocation5 + $0x18] sm:$0xff]
        %v417 = vld [vmem:[%s2] sm:$0x1]
        %v419 = vlaneseq
        %v420 = vshrl.u32 %v419, 7
        %v421 = vsub.s32 0, %v420
        %v422 = vrot.slane %v417, %v421
        %vm424 = vcmask 261120
        %v426 = vsel %vm424, %v412, 0
        %428 = vmatprep.subr.mxu0 0.0
        %429 = vmatpush1.msra.mxu0 %v413
        %430 = vmatprep.subr.mxu0 0.0
        %431 = vmatpush1.msra.mxu0 %v414
        %432 = vmatprep.subr.mxu0 0.0
        %433 = vmatpush1.msra.mxu0 %v415
        %434 = vmatprep.subr.mxu0 0.0
        %435 = vmatpush1.msra.mxu0 %v416
        %436 = vmatprep.subr.mxu0 0.0
        %437 = vmatpush1.msra.mxu0 0.0
        %438 = vmatprep.subr.mxu0 0.0
        %439 = vmatpush1.msra.mxu0 0.0
        %440 = vmatprep.subr.mxu0 0.0
        %441 = vmatpush1.msra.mxu0 0.0
        %442 = vmatprep.subr.mxu0 0.0
        %443 = vmatpush1.msra.mxu0 0.0
        %444 = vmatprep.subr.mxu0 0.0
        %445 = vmatpush1.msra.mxu0 0.0
        %446 = vmatprep.subr.mxu0 0.0
        %447 = vmatpush1.msra.mxu0 0.0
        %448 = vmatprep.subr.mxu0 0.0
        %449 = vmatpush1.msra.mxu0 0.0
        %450 = vmatprep.subr.mxu0 0.0
        %451 = vmatpush1.msra.mxu0 0.0
        %452 = vmatprep.subr.mxu0 0.0
        %453 = vmatpush1.msra.mxu0 0.0
        %454 = vmatprep.subr.mxu0 0.0
        %455 = vmatpush1.msra.mxu0 0.0
        %456 = vmatprep.subr.mxu0 0.0
        %457 = vmatpush1.msra.mxu0 0.0
        %458 = vmatprep.subr.mxu0 0.0
        %459 = vmatpush1.msra.mxu0 0.0
        %460 = vmatprep.subr.mxu0 0.0
        %461 = vmatpush1.msra.mxu0 0.0
        %462 = vmatprep.subr.mxu0 0.0
        %463 = vmatpush1.msra.mxu0 0.0
        %464 = vmatprep.subr.mxu0 0.0
        %465 = vmatpush1.msra.mxu0 0.0
        %466 = vmatprep.subr.mxu0 0.0
        %467 = vmatpush1.msra.mxu0 0.0
        %468 = vmatprep.subr.mxu0 0.0
        %469 = vmatpush1.msra.mxu0 0.0
        %470 = vmatprep.subr.mxu0 0.0
        %471 = vmatpush1.msra.mxu0 0.0
        %472 = vmatprep.subr.mxu0 0.0
        %473 = vmatpush1.msra.mxu0 0.0
        %474 = vmatprep.subr.mxu0 0.0
        %475 = vmatpush1.msra.mxu0 0.0
        %476 = vmatprep.subr.mxu0 0.0
        %477 = vmatpush1.msra.mxu0 0.0
        %478 = vmatprep.subr.mxu0 0.0
        %479 = vmatpush1.msra.mxu0 0.0
        %480 = vmatprep.subr.mxu0 0.0
        %481 = vmatpush1.msra.mxu0 0.0
        %482 = vmatprep.subr.mxu0 0.0
        %483 = vmatpush1.msra.mxu0 0.0
        %484 = vmatprep.subr.mxu0 0.0
        %485 = vmatpush1.msra.mxu0 0.0
        %486 = vmatprep.subr.mxu0 0.0
        %487 = vmatpush1.msra.mxu0 0.0
        %488 = vmatprep.subr.mxu0 0.0
        %489 = vmatpush1.msra.mxu0 0.0
        %490 = vmatprep.subr.mxu0 0.0
        %491 = vmatpush1.msra.mxu0 0.0
        %492 = vmatprep.mubr.f32.mxu0 0.0
        %493 = vmatmul.mubr.f32.gmra.mrb[0].mxu0 %v426
        %v494 = vpop.f32.mrb[0].mxu0
        %v495 = vadd.f32 %v422, %v494
        %v496 = vpop.f32.mrb[0].mxu0
        %497 = vdwg.mxu0
        %v498 = vmax.f32 %v495, 0.0
        %v499 = vadd.f32 %v498, %v412
        %s500 = scalar_lea.vmem [#allocation5], 32
        %v501 = vld [vmem:[%s500] sm:$0xff]
        %v502 = vld [vmem:[%s500 + $0x8] sm:$0xff]
        %v503 = vld [vmem:[%s500 + $0x10] sm:$0xff]
        %v504 = vld [vmem:[%s500 + $0x18] sm:$0xff]
        %s505 = scalar_lea.vmem %s2, 1
        %v506 = vld [vmem:[%s505] sm:$0x1]
        %v508 = vlaneseq
        %v509 = vshrl.u32 %v508, 7
        %v510 = vsub.s32 0, %v509
        %v511 = vrot.slane %v506, %v510
        %v514 = vsel %vm424, %v499, 0
        %516 = vmatprep.subr.mxu0 0.0
        %517 = vmatpush1.msra.mxu0 %v501
        %518 = vmatprep.subr.mxu0 0.0
        %519 = vmatpush1.msra.mxu0 %v502
        %520 = vmatprep.subr.mxu0 0.0
        %521 = vmatpush1.msra.mxu0 %v503
        %522 = vmatprep.subr.mxu0 0.0
        %523 = vmatpush1.msra.mxu0 %v504
        %524 = vmatprep.subr.mxu0 0.0
        %525 = vmatpush1.msra.mxu0 0.0
        %526 = vmatprep.subr.mxu0 0.0
        %527 = vmatpush1.msra.mxu0 0.0
        %528 = vmatprep.subr.mxu0 0.0
        %529 = vmatpush1.msra.mxu0 0.0
        %530 = vmatprep.subr.mxu0 0.0
        %531 = vmatpush1.msra.mxu0 0.0
        %532 = vmatprep.subr.mxu0 0.0
        %533 = vmatpush1.msra.mxu0 0.0
        %534 = vmatprep.subr.mxu0 0.0
        %535 = vmatpush1.msra.mxu0 0.0
        %536 = vmatprep.subr.mxu0 0.0
        %537 = vmatpush1.msra.mxu0 0.0
        %538 = vmatprep.subr.mxu0 0.0
        %539 = vmatpush1.msra.mxu0 0.0
        %540 = vmatprep.subr.mxu0 0.0
        %541 = vmatpush1.msra.mxu0 0.0
        %542 = vmatprep.subr.mxu0 0.0
        %543 = vmatpush1.msra.mxu0 0.0
        %544 = vmatprep.subr.mxu0 0.0
        %545 = vmatpush1.msra.mxu0 0.0
        %546 = vmatprep.subr.mxu0 0.0
        %547 = vmatpush1.msra.mxu0 0.0
        %548 = vmatprep.subr.mxu0 0.0
        %549 = vmatpush1.msra.mxu0 0.0
        %550 = vmatprep.subr.mxu0 0.0
        %551 = vmatpush1.msra.mxu0 0.0
        %552 = vmatprep.subr.mxu0 0.0
        %553 = vmatpush1.msra.mxu0 0.0
        %554 = vmatprep.subr.mxu0 0.0
        %555 = vmatpush1.msra.mxu0 0.0
        %556 = vmatprep.subr.mxu0 0.0
        %557 = vmatpush1.msra.mxu0 0.0
        %558 = vmatprep.subr.mxu0 0.0
        %559 = vmatpush1.msra.mxu0 0.0
        %560 = vmatprep.subr.mxu0 0.0
        %561 = vmatpush1.msra.mxu0 0.0
        %562 = vmatprep.subr.mxu0 0.0
        %563 = vmatpush1.msra.mxu0 0.0
        %564 = vmatprep.subr.mxu0 0.0
        %565 = vmatpush1.msra.mxu0 0.0
        %566 = vmatprep.subr.mxu0 0.0
        %567 = vmatpush1.msra.mxu0 0.0
        %568 = vmatprep.subr.mxu0 0.0
        %569 = vmatpush1.msra.mxu0 0.0
        %570 = vmatprep.subr.mxu0 0.0
        %571 = vmatpush1.msra.mxu0 0.0
        %572 = vmatprep.subr.mxu0 0.0
        %573 = vmatpush1.msra.mxu0 0.0
        %574 = vmatprep.subr.mxu0 0.0
        %575 = vmatpush1.msra.mxu0 0.0
        %576 = vmatprep.subr.mxu0 0.0
        %577 = vmatpush1.msra.mxu0 0.0
        %578 = vmatprep.subr.mxu0 0.0
        %579 = vmatpush1.msra.mxu0 0.0
        %580 = vmatprep.mubr.f32.mxu0 0.0
        %581 = vmatmul.mubr.f32.gmra.mrb[0].mxu0 %v514
        %v582 = vpop.f32.mrb[0].mxu0
        %v583 = vadd.f32 %v511, %v582
        %v584 = vpop.f32.mrb[0].mxu0
        %585 = vdwg.mxu0
        %v586 = vmax.f32 %v583, 0.0
        %v587 = vadd.f32 %v586, %v499
        %s588 = scalar_lea.vmem [#allocation5], 64
        %v589 = vld [vmem:[%s588] sm:$0xff]
        %v590 = vld [vmem:[%s588 + $0x8] sm:$0xff]
        %v591 = vld [vmem:[%s588 + $0x10] sm:$0xff]
        %v592 = vld [vmem:[%s588 + $0x18] sm:$0xff]
        %s593 = scalar_lea.vmem %s2, 2
        %v594 = vld [vmem:[%s593] sm:$0x1]
        %v596 = vlaneseq
        %v597 = vshrl.u32 %v596, 7
        %v598 = vsub.s32 0, %v597
        %v599 = vrot.slane %v594, %v598
        %v602 = vsel %vm424, %v587, 0
        %604 = vmatprep.subr.mxu0 0.0
        %605 = vmatpush1.msra.mxu0 %v589
        %606 = vmatprep.subr.mxu0 0.0
        %607 = vmatpush1.msra.mxu0 %v590
        %608 = vmatprep.subr.mxu0 0.0
        %609 = vmatpush1.msra.mxu0 %v591
        %610 = vmatprep.subr.mxu0 0.0
        %611 = vmatpush1.msra.mxu0 %v592
        %612 = vmatprep.subr.mxu0 0.0
        %613 = vmatpush1.msra.mxu0 0.0
        %614 = vmatprep.subr.mxu0 0.0
        %615 = vmatpush1.msra.mxu0 0.0
        %616 = vmatprep.subr.mxu0 0.0
        %617 = vmatpush1.msra.mxu0 0.0
        %618 = vmatprep.subr.mxu0 0.0
        %619 = vmatpush1.msra.mxu0 0.0
        %620 = vmatprep.subr.mxu0 0.0
        %621 = vmatpush1.msra.mxu0 0.0
        %622 = vmatprep.subr.mxu0 0.0
        %623 = vmatpush1.msra.mxu0 0.0
        %624 = vmatprep.subr.mxu0 0.0
        %625 = vmatpush1.msra.mxu0 0.0
        %626 = vmatprep.subr.mxu0 0.0
        %627 = vmatpush1.msra.mxu0 0.0
        %628 = vmatprep.subr.mxu0 0.0
        %629 = vmatpush1.msra.mxu0 0.0
        %630 = vmatprep.subr.mxu0 0.0
        %631 = vmatpush1.msra.mxu0 0.0
        %632 = vmatprep.subr.mxu0 0.0
        %633 = vmatpush1.msra.mxu0 0.0
        %634 = vmatprep.subr.mxu0 0.0
        %635 = vmatpush1.msra.mxu0 0.0
        %636 = vmatprep.subr.mxu0 0.0
        %637 = vmatpush1.msra.mxu0 0.0
        %638 = vmatprep.subr.mxu0 0.0
        %639 = vmatpush1.msra.mxu0 0.0
        %640 = vmatprep.subr.mxu0 0.0
        %641 = vmatpush1.msra.mxu0 0.0
        %642 = vmatprep.subr.mxu0 0.0
        %643 = vmatpush1.msra.mxu0 0.0
        %644 = vmatprep.subr.mxu0 0.0
        %645 = vmatpush1.msra.mxu0 0.0
        %646 = vmatprep.subr.mxu0 0.0
        %647 = vmatpush1.msra.mxu0 0.0
        %648 = vmatprep.subr.mxu0 0.0
        %649 = vmatpush1.msra.mxu0 0.0
        %650 = vmatprep.subr.mxu0 0.0
        %651 = vmatpush1.msra.mxu0 0.0
        %652 = vmatprep.subr.mxu0 0.0
        %653 = vmatpush1.msra.mxu0 0.0
        %654 = vmatprep.subr.mxu0 0.0
        %655 = vmatpush1.msra.mxu0 0.0
        %656 = vmatprep.subr.mxu0 0.0
        %657 = vmatpush1.msra.mxu0 0.0
        %658 = vmatprep.subr.mxu0 0.0
        %659 = vmatpush1.msra.mxu0 0.0
        %660 = vmatprep.subr.mxu0 0.0
        %661 = vmatpush1.msra.mxu0 0.0
        %662 = vmatprep.subr.mxu0 0.0
        %663 = vmatpush1.msra.mxu0 0.0
        %664 = vmatprep.subr.mxu0 0.0
        %665 = vmatpush1.msra.mxu0 0.0
        %666 = vmatprep.subr.mxu0 0.0
        %667 = vmatpush1.msra.mxu0 0.0
        %668 = vmatprep.mubr.f32.mxu0 0.0
        %669 = vmatmul.mubr.f32.gmra.mrb[0].mxu0 %v602
        %v670 = vpop.f32.mrb[0].mxu0
        %v671 = vadd.f32 %v599, %v670
        %v672 = vpop.f32.mrb[0].mxu0
        %673 = vdwg.mxu0
        %v674 = vmax.f32 %v671, 0.0
        %v675 = vadd.f32 %v674, %v587
        %s676 = scalar_lea.vmem [#allocation5], 96
        %v677 = vld [vmem:[%s676] sm:$0xff]
        %v678 = vld [vmem:[%s676 + $0x8] sm:$0xff]
        %v679 = vld [vmem:[%s676 + $0x10] sm:$0xff]
        %v680 = vld [vmem:[%s676 + $0x18] sm:$0xff]
        %s681 = scalar_lea.vmem %s2, 3
        %v682 = vld [vmem:[%s681] sm:$0x1]
        %v684 = vlaneseq
        %v685 = vshrl.u32 %v684, 7
        %v686 = vsub.s32 0, %v685
        %v687 = vrot.slane %v682, %v686
        %v690 = vsel %vm424, %v675, 0
        %692 = vmatprep.subr.mxu0 0.0
        %693 = vmatpush1.msra.mxu0 %v677
        %694 = vmatprep.subr.mxu0 0.0
        %695 = vmatpush1.msra.mxu0 %v678
        %696 = vmatprep.subr.mxu0 0.0
        %697 = vmatpush1.msra.mxu0 %v679
        %698 = vmatprep.subr.mxu0 0.0
        %699 = vmatpush1.msra.mxu0 %v680
        %700 = vmatprep.subr.mxu0 0.0
        %701 = vmatpush1.msra.mxu0 0.0
        %702 = vmatprep.subr.mxu0 0.0
        %703 = vmatpush1.msra.mxu0 0.0
        %704 = vmatprep.subr.mxu0 0.0
        %705 = vmatpush1.msra.mxu0 0.0
        %706 = vmatprep.subr.mxu0 0.0
        %707 = vmatpush1.msra.mxu0 0.0
        %708 = vmatprep.subr.mxu0 0.0
        %709 = vmatpush1.msra.mxu0 0.0
        %710 = vmatprep.subr.mxu0 0.0
        %711 = vmatpush1.msra.mxu0 0.0
        %712 = vmatprep.subr.mxu0 0.0
        %713 = vmatpush1.msra.mxu0 0.0
        %714 = vmatprep.subr.mxu0 0.0
        %715 = vmatpush1.msra.mxu0 0.0
        %716 = vmatprep.subr.mxu0 0.0
        %717 = vmatpush1.msra.mxu0 0.0
        %718 = vmatprep.subr.mxu0 0.0
        %719 = vmatpush1.msra.mxu0 0.0
        %720 = vmatprep.subr.mxu0 0.0
        %721 = vmatpush1.msra.mxu0 0.0
        %722 = vmatprep.subr.mxu0 0.0
        %723 = vmatpush1.msra.mxu0 0.0
        %724 = vmatprep.subr.mxu0 0.0
        %725 = vmatpush1.msra.mxu0 0.0
        %726 = vmatprep.subr.mxu0 0.0
        %727 = vmatpush1.msra.mxu0 0.0
        %728 = vmatprep.subr.mxu0 0.0
        %729 = vmatpush1.msra.mxu0 0.0
        %730 = vmatprep.subr.mxu0 0.0
        %731 = vmatpush1.msra.mxu0 0.0
        %732 = vmatprep.subr.mxu0 0.0
        %733 = vmatpush1.msra.mxu0 0.0
        %734 = vmatprep.subr.mxu0 0.0
        %735 = vmatpush1.msra.mxu0 0.0
        %736 = vmatprep.subr.mxu0 0.0
        %737 = vmatpush1.msra.mxu0 0.0
        %738 = vmatprep.subr.mxu0 0.0
        %739 = vmatpush1.msra.mxu0 0.0
        %740 = vmatprep.subr.mxu0 0.0
        %741 = vmatpush1.msra.mxu0 0.0
        %742 = vmatprep.subr.mxu0 0.0
        %743 = vmatpush1.msra.mxu0 0.0
        %744 = vmatprep.subr.mxu0 0.0
        %745 = vmatpush1.msra.mxu0 0.0
        %746 = vmatprep.subr.mxu0 0.0
        %747 = vmatpush1.msra.mxu0 0.0
        %748 = vmatprep.subr.mxu0 0.0
        %749 = vmatpush1.msra.mxu0 0.0
        %750 = vmatprep.subr.mxu0 0.0
        %751 = vmatpush1.msra.mxu0 0.0
        %752 = vmatprep.subr.mxu0 0.0
        %753 = vmatpush1.msra.mxu0 0.0
        %754 = vmatprep.subr.mxu0 0.0
        %755 = vmatpush1.msra.mxu0 0.0
        %756 = vmatprep.mubr.f32.mxu0 0.0
        %757 = vmatmul.mubr.f32.gmra.mrb[0].mxu0 %v690
        %v758 = vpop.f32.mrb[0].mxu0
        %v759 = vadd.f32 %v687, %v758
        %v760 = vpop.f32.mrb[0].mxu0
        %761 = vdwg.mxu0
        %v762 = vmax.f32 %v759, 0.0
        %v763 = vadd.f32 %v762, %v675
        %s764 = scalar_lea.vmem [#allocation5], 128
        %v765 = vld [vmem:[%s764] sm:$0xff]
        %v766 = vld [vmem:[%s764 + $0x8] sm:$0xff]
        %v767 = vld [vmem:[%s764 + $0x10] sm:$0xff]
        %v768 = vld [vmem:[%s764 + $0x18] sm:$0xff]
        %s769 = scalar_lea.vmem %s2, 4
        %v770 = vld [vmem:[%s769] sm:$0x1]
        %v772 = vlaneseq
        %v773 = vshrl.u32 %v772, 7
        %v774 = vsub.s32 0, %v773
        %v775 = vrot.slane %v770, %v774
        %v778 = vsel %vm424, %v763, 0
        %780 = vmatprep.subr.mxu0 0.0
        %781 = vmatpush1.msra.mxu0 %v765
        %782 = vmatprep.subr.mxu0 0.0
        %783 = vmatpush1.msra.mxu0 %v766
        %784 = vmatprep.subr.mxu0 0.0
        %785 = vmatpush1.msra.mxu0 %v767
        %786 = vmatprep.subr.mxu0 0.0
        %787 = vmatpush1.msra.mxu0 %v768
        %788 = vmatprep.subr.mxu0 0.0
        %789 = vmatpush1.msra.mxu0 0.0
        %790 = vmatprep.subr.mxu0 0.0
        %791 = vmatpush1.msra.mxu0 0.0
        %792 = vmatprep.subr.mxu0 0.0
        %793 = vmatpush1.msra.mxu0 0.0
        %794 = vmatprep.subr.mxu0 0.0
        %795 = vmatpush1.msra.mxu0 0.0
        %796 = vmatprep.subr.mxu0 0.0
        %797 = vmatpush1.msra.mxu0 0.0
        %798 = vmatprep.subr.mxu0 0.0
        %799 = vmatpush1.msra.mxu0 0.0
        %800 = vmatprep.subr.mxu0 0.0
        %801 = vmatpush1.msra.mxu0 0.0
        %802 = vmatprep.subr.mxu0 0.0
        %803 = vmatpush1.msra.mxu0 0.0
        %804 = vmatprep.subr.mxu0 0.0
        %805 = vmatpush1.msra.mxu0 0.0
        %806 = vmatprep.subr.mxu0 0.0
        %807 = vmatpush1.msra.mxu0 0.0
        %808 = vmatprep.subr.mxu0 0.0
        %809 = vmatpush1.msra.mxu0 0.0
        %810 = vmatprep.subr.mxu0 0.0
        %811 = vmatpush1.msra.mxu0 0.0
        %812 = vmatprep.subr.mxu0 0.0
        %813 = vmatpush1.msra.mxu0 0.0
        %814 = vmatprep.subr.mxu0 0.0
        %815 = vmatpush1.msra.mxu0 0.0
        %816 = vmatprep.subr.mxu0 0.0
        %817 = vmatpush1.msra.mxu0 0.0
        %818 = vmatprep.subr.mxu0 0.0
        %819 = vmatpush1.msra.mxu0 0.0
        %820 = vmatprep.subr.mxu0 0.0
        %821 = vmatpush1.msra.mxu0 0.0
        %822 = vmatprep.subr.mxu0 0.0
        %823 = vmatpush1.msra.mxu0 0.0
        %824 = vmatprep.subr.mxu0 0.0
        %825 = vmatpush1.msra.mxu0 0.0
        %826 = vmatprep.subr.mxu0 0.0
        %827 = vmatpush1.msra.mxu0 0.0
        %828 = vmatprep.subr.mxu0 0.0
        %829 = vmatpush1.msra.mxu0 0.0
        %830 = vmatprep.subr.mxu0 0.0
        %831 = vmatpush1.msra.mxu0 0.0
        %832 = vmatprep.subr.mxu0 0.0
        %833 = vmatpush1.msra.mxu0 0.0
        %834 = vmatprep.subr.mxu0 0.0
        %835 = vmatpush1.msra.mxu0 0.0
        %836 = vmatprep.subr.mxu0 0.0
        %837 = vmatpush1.msra.mxu0 0.0
        %838 = vmatprep.subr.mxu0 0.0
        %839 = vmatpush1.msra.mxu0 0.0
        %840 = vmatprep.subr.mxu0 0.0
        %841 = vmatpush1.msra.mxu0 0.0
        %842 = vmatprep.subr.mxu0 0.0
        %843 = vmatpush1.msra.mxu0 0.0
        %844 = vmatprep.mubr.f32.mxu0 0.0
        %845 = vmatmul.mubr.f32.gmra.mrb[0].mxu0 %v778
        %v846 = vpop.f32.mrb[0].mxu0
        %v847 = vadd.f32 %v775, %v846
        %v848 = vpop.f32.mrb[0].mxu0
        %849 = vdwg.mxu0
        %v850 = vmax.f32 %v847, 0.0
        %v851 = vadd.f32 %v850, %v763
        %v852 = vld [vmem:[%s353] sm:$0xff]
        %v853 = vld [vmem:[%s353 + $0x8] sm:$0xff]
        %v854 = vld [vmem:[%s353 + $0x10] sm:$0xff]
        %v855 = vpack.c.bf16 %v851, %v851
        %v856 = vld [vmem:[%s344] sm:$0xff]
        %v857 = vld [vmem:[%s344 + $0x8] sm:$0xff]
        %v858 = vld [vmem:[%s344 + $0x10] sm:$0xff]
        %v859 = vld [vmem:[%s344 + $0x18] sm:$0xff]
        %v860 = vld [vmem:[%s344 + $0x20] sm:$0xff]
        %v861 = vld [vmem:[%s344 + $0x28] sm:$0xff]
        %v862 = vld [vmem:[%s344 + $0x30] sm:$0xff]
        %v863 = vld [vmem:[%s344 + $0x38] sm:$0xff]
        %v864 = vld [vmem:[%s344 + $0x40] sm:$0xff]
        %v865 = vld [vmem:[%s344 + $0x48] sm:$0xff]
        %v866 = vld [vmem:[%s344 + $0x50] sm:$0xff]
        %v867 = vld [vmem:[%s344 + $0x58] sm:$0xff]
        %v868 = vld [vmem:[%s344 + $0x60] sm:$0xff]
        %v869 = vld [vmem:[%s344 + $0x68] sm:$0xff]
        %v870 = vld [vmem:[%s344 + $0x70] sm:$0xff]
        %v871 = vld [vmem:[%s344 + $0x78] sm:$0xff]
        %v872 = vld [vmem:[%s344 + $0x80] sm:$0xff]
        %v873 = vld [vmem:[%s344 + $0x88] sm:$0xff]
        %v874 = vld [vmem:[%s344 + $0x90] sm:$0xff]
        %v875 = vld [vmem:[%s344 + $0x98] sm:$0xff]
        %v876 = vld [vmem:[%s344 + $0xa0] sm:$0xff]
        %v877 = vld [vmem:[%s344 + $0xa8] sm:$0xff]
        %v878 = vld [vmem:[%s344 + $0xb0] sm:$0xff]
        %v879 = vld [vmem:[%s344 + $0xb8] sm:$0xff]
        %v883 = vlaneseq
        %v884 = vshrl.u32 %v883, 7
        %v885 = vsub.s32 0, %v884
        %v886 = vrot.slane %v852, %v885
        %v887 = vlaneseq
        %v888 = vshrl.u32 %v887, 7
        %v889 = vsub.s32 2, %v888
        %v890 = vrot.slane %v852, %v889
        %v891 = vlaneseq
        %v892 = vshrl.u32 %v891, 7
        %v893 = vsub.s32 4, %v892
        %v894 = vrot.slane %v852, %v893
        %v895 = vlaneseq
        %v896 = vshrl.u32 %v895, 7
        %v897 = vsub.s32 6, %v896
        %v898 = vrot.slane %v852, %v897
        %v899 = vlaneseq
        %v900 = vshrl.u32 %v899, 7
        %v901 = vsub.s32 0, %v900
        %v902 = vrot.slane %v853, %v901
        %v903 = vlaneseq
        %v904 = vshrl.u32 %v903, 7
        %v905 = vsub.s32 2, %v904
        %v906 = vrot.slane %v853, %v905
        %v907 = vlaneseq
        %v908 = vshrl.u32 %v907, 7
        %v909 = vsub.s32 4, %v908
        %v910 = vrot.slane %v853, %v909
        %v911 = vlaneseq
        %v912 = vshrl.u32 %v911, 7
        %v913 = vsub.s32 6, %v912
        %v914 = vrot.slane %v853, %v913
        %v915 = vlaneseq
        %v916 = vshrl.u32 %v915, 7
        %v917 = vsub.s32 0, %v916
        %v918 = vrot.slane %v854, %v917
        %v919 = vlaneseq
        %v920 = vshrl.u32 %v919, 7
        %v921 = vsub.s32 2, %v920
        %v922 = vrot.slane %v854, %v921
        %v923 = vlaneseq
        %v924 = vshrl.u32 %v923, 7
        %v925 = vsub.s32 4, %v924
        %v926 = vrot.slane %v854, %v925
        %v927 = vlaneseq
        %v928 = vshrl.u32 %v927, 7
        %v929 = vsub.s32 6, %v928
        %v930 = vrot.slane %v854, %v929
        %v943 = vlaneseq
        %v944 = vshrl.u32 %v943, 7
        %v945 = vsub.s32 0, %v944
        %v946 = vrot.slane %v886, %v945
        %v947 = vlaneseq
        %v948 = vshrl.u32 %v947, 7
        %v949 = vsub.s32 0, %v948
        %v950 = vrot.slane %v890, %v949
        %v951 = vlaneseq
        %v952 = vshrl.u32 %v951, 7
        %v953 = vsub.s32 0, %v952
        %v954 = vrot.slane %v894, %v953
        %v955 = vlaneseq
        %v956 = vshrl.u32 %v955, 7
        %v957 = vsub.s32 0, %v956
        %v958 = vrot.slane %v898, %v957
        %v959 = vlaneseq
        %v960 = vshrl.u32 %v959, 7
        %v961 = vsub.s32 0, %v960
        %v962 = vrot.slane %v902, %v961
        %v963 = vlaneseq
        %v964 = vshrl.u32 %v963, 7
        %v965 = vsub.s32 0, %v964
        %v966 = vrot.slane %v906, %v965
        %v967 = vlaneseq
        %v968 = vshrl.u32 %v967, 7
        %v969 = vsub.s32 0, %v968
        %v970 = vrot.slane %v910, %v969
        %v971 = vlaneseq
        %v972 = vshrl.u32 %v971, 7
        %v973 = vsub.s32 0, %v972
        %v974 = vrot.slane %v914, %v973
        %v975 = vlaneseq
        %v976 = vshrl.u32 %v975, 7
        %v977 = vsub.s32 0, %v976
        %v978 = vrot.slane %v918, %v977
        %v979 = vlaneseq
        %v980 = vshrl.u32 %v979, 7
        %v981 = vsub.s32 0, %v980
        %v982 = vrot.slane %v922, %v981
        %v983 = vlaneseq
        %v984 = vshrl.u32 %v983, 7
        %v985 = vsub.s32 0, %v984
        %v986 = vrot.slane %v926, %v985
        %v987 = vlaneseq
        %v988 = vshrl.u32 %v987, 7
        %v989 = vsub.s32 0, %v988
        %v990 = vrot.slane %v930, %v989
        %v1015 = vunpack.c.l.b16 %v856
        %v1016 = vunpack.c.h.b16 %v856
        %v1017 = vunpack.c.l.b16 %v857
        %v1018 = vunpack.c.h.b16 %v857
        %v1019 = vunpack.c.l.b16 %v858
        %v1020 = vunpack.c.h.b16 %v858
        %v1021 = vunpack.c.l.b16 %v859
        %v1022 = vunpack.c.h.b16 %v859
        %v1023 = vunpack.c.l.b16 %v860
        %v1024 = vunpack.c.h.b16 %v860
        %v1025 = vunpack.c.l.b16 %v861
        %v1026 = vunpack.c.h.b16 %v861
        %v1027 = vunpack.c.l.b16 %v862
        %v1028 = vunpack.c.h.b16 %v862
        %v1029 = vunpack.c.l.b16 %v863
        %v1030 = vunpack.c.h.b16 %v863
        %v1031 = vunpack.c.l.b16 %v864
        %v1032 = vunpack.c.h.b16 %v864
        %v1033 = vunpack.c.l.b16 %v865
        %v1034 = vunpack.c.h.b16 %v865
        %v1035 = vunpack.c.l.b16 %v866
        %v1036 = vunpack.c.h.b16 %v866
        %v1037 = vunpack.c.l.b16 %v867
        %v1038 = vunpack.c.h.b16 %v867
        %v1039 = vunpack.c.l.b16 %v868
        %v1040 = vunpack.c.h.b16 %v868
        %v1041 = vunpack.c.l.b16 %v869
        %v1042 = vunpack.c.h.b16 %v869
        %v1043 = vunpack.c.l.b16 %v870
        %v1044 = vunpack.c.h.b16 %v870
        %v1045 = vunpack.c.l.b16 %v871
        %v1046 = vunpack.c.h.b16 %v871
        %v1047 = vunpack.c.l.b16 %v872
        %v1048 = vunpack.c.h.b16 %v872
        %v1049 = vunpack.c.l.b16 %v873
        %v1050 = vunpack.c.h.b16 %v873
        %v1051 = vunpack.c.l.b16 %v874
        %v1052 = vunpack.c.h.b16 %v874
        %v1053 = vunpack.c.l.b16 %v875
        %v1054 = vunpack.c.h.b16 %v875
        %v1055 = vunpack.c.l.b16 %v876
        %v1056 = vunpack.c.h.b16 %v876
        %v1057 = vunpack.c.l.b16 %v877
        %v1058 = vunpack.c.h.b16 %v877
        %v1059 = vunpack.c.l.b16 %v878
        %v1060 = vunpack.c.h.b16 %v878
        %v1061 = vunpack.c.l.b16 %v879
        %v1062 = vunpack.c.h.b16 %v879
        %v1063 = vpack.c.b16 %v1027, %v1015
        %v1064 = vpack.c.b16 %v1028, %v1016
        %v1065 = vpack.c.b16 %v1029, %v1017
        %v1066 = vpack.c.b16 %v1030, %v1018
        %v1067 = vpack.c.b16 %v1031, %v1019
        %v1068 = vpack.c.b16 %v1032, %v1020
        %v1069 = vpack.c.b16 %v1033, %v1021
        %v1070 = vpack.c.b16 %v1034, %v1022
        %v1071 = vpack.c.b16 %v1035, %v1023
        %v1072 = vpack.c.b16 %v1036, %v1024
        %v1073 = vpack.c.b16 %v1037, %v1025
        %v1074 = vpack.c.b16 %v1038, %v1026
        %v1075 = vpack.c.b16 %v1051, %v1039
        %v1076 = vpack.c.b16 %v1052, %v1040
        %v1077 = vpack.c.b16 %v1053, %v1041
        %v1078 = vpack.c.b16 %v1054, %v1042
        %v1079 = vpack.c.b16 %v1055, %v1043
        %v1080 = vpack.c.b16 %v1056, %v1044
        %v1081 = vpack.c.b16 %v1057, %v1045
        %v1082 = vpack.c.b16 %v1058, %v1046
        %v1083 = vpack.c.b16 %v1059, %v1047
        %v1084 = vpack.c.b16 %v1060, %v1048
        %v1085 = vpack.c.b16 %v1061, %v1049
        %v1086 = vpack.c.b16 %v1062, %v1050
        %v1112 = vsel %vm424, %v855, 0
        %1114 = vmatprep.subr.bf16.mxu0 %v1064
        %1115 = vmatpush1.bf16.msra.mxu0 %v1063
        %1116 = vmatprep.subr.bf16.mxu0 %v1076
        %1117 = vmatpush1.bf16.msra.mxu0 %v1075
        %1118 = vmatprep.subr.bf16.mxu0 0
        %1119 = vmatpush1.bf16.msra.mxu0 0
        %1120 = vmatprep.subr.bf16.mxu0 0
        %1121 = vmatpush1.bf16.msra.mxu0 0
        %1122 = vmatprep.subr.bf16.mxu0 0
        %1123 = vmatpush1.bf16.msra.mxu0 0
        %1124 = vmatprep.subr.bf16.mxu0 0
        %1125 = vmatpush1.bf16.msra.mxu0 0
        %1126 = vmatprep.subr.bf16.mxu0 0
        %1127 = vmatpush1.bf16.msra.mxu0 0
        %1128 = vmatprep.subr.bf16.mxu0 0
        %1129 = vmatpush1.bf16.msra.mxu0 0
        %1130 = vmatprep.subr.bf16.mxu0 0
        %1131 = vmatpush1.bf16.msra.mxu0 0
        %1132 = vmatprep.subr.bf16.mxu0 0
        %1133 = vmatpush1.bf16.msra.mxu0 0
        %1134 = vmatprep.subr.bf16.mxu0 0
        %1135 = vmatpush1.bf16.msra.mxu0 0
        %1136 = vmatprep.subr.bf16.mxu0 0
        %1137 = vmatpush1.bf16.msra.mxu0 0
        %1138 = vmatprep.subr.bf16.mxu0 0
        %1139 = vmatpush1.bf16.msra.mxu0 0
        %1140 = vmatprep.subr.bf16.mxu0 0
        %1141 = vmatpush1.bf16.msra.mxu0 0
        %1142 = vmatprep.subr.bf16.mxu0 0
        %1143 = vmatpush1.bf16.msra.mxu0 0
        %1144 = vmatprep.subr.bf16.mxu0 0
        %1145 = vmatpush1.bf16.msra.mxu0 0
        %1146 = vmatprep.mubr.bf16.mxu0 0
        %1147 = vmatmul.mubr.bf16.gmra.mrb[0].mxu0 %v1112
        %v1148 = vpop.f32.mrb[0].mxu0
        %v1149 = vadd.f32 %v946, %v1148
        %v1150 = vpop.f32.mrb[0].mxu0
        %v1151 = vadd.f32 %v950, %v1150
        %v1152 = vpop.f32.mrb[0].mxu0
        %v1153 = vpop.f32.mrb[0].mxu0
        %1154 = vdwg.mxu0
        %1155 = vmatprep.subr.bf16.mxu0 %v1066
        %1156 = vmatpush1.bf16.msra.mxu0 %v1065
        %1157 = vmatprep.subr.bf16.mxu0 %v1078
        %1158 = vmatpush1.bf16.msra.mxu0 %v1077
        %1159 = vmatprep.subr.bf16.mxu0 0
        %1160 = vmatpush1.bf16.msra.mxu0 0
        %1161 = vmatprep.subr.bf16.mxu0 0
        %1162 = vmatpush1.bf16.msra.mxu0 0
        %1163 = vmatprep.subr.bf16.mxu0 0
        %1164 = vmatpush1.bf16.msra.mxu0 0
        %1165 = vmatprep.subr.bf16.mxu0 0
        %1166 = vmatpush1.bf16.msra.mxu0 0
        %1167 = vmatprep.subr.bf16.mxu0 0
        %1168 = vmatpush1.bf16.msra.mxu0 0
        %1169 = vmatprep.subr.bf16.mxu0 0
        %1170 = vmatpush1.bf16.msra.mxu0 0
        %1171 = vmatprep.subr.bf16.mxu0 0
        %1172 = vmatpush1.bf16.msra.mxu0 0
        %1173 = vmatprep.subr.bf16.mxu0 0
        %1174 = vmatpush1.bf16.msra.mxu0 0
        %1175 = vmatprep.subr.bf16.mxu0 0
        %1176 = vmatpush1.bf16.msra.mxu0 0
        %1177 = vmatprep.subr.bf16.mxu0 0
        %1178 = vmatpush1.bf16.msra.mxu0 0
        %1179 = vmatprep.subr.bf16.mxu0 0
        %1180 = vmatpush1.bf16.msra.mxu0 0
        %1181 = vmatprep.subr.bf16.mxu0 0
        %1182 = vmatpush1.bf16.msra.mxu0 0
        %1183 = vmatprep.subr.bf16.mxu0 0
        %1184 = vmatpush1.bf16.msra.mxu0 0
        %1185 = vmatprep.subr.bf16.mxu0 0
        %1186 = vmatpush1.bf16.msra.mxu0 0
        %1187 = vmatprep.mubr.bf16.mxu0 0
        %1188 = vmatmul.mubr.bf16.gmra.mrb[0].mxu0 %v1112
        %v1189 = vpop.f32.mrb[0].mxu0
        %v1190 = vadd.f32 %v954, %v1189
        %v1191 = vpop.f32.mrb[0].mxu0
        %v1192 = vadd.f32 %v958, %v1191
        %v1193 = vpop.f32.mrb[0].mxu0
        %v1194 = vpop.f32.mrb[0].mxu0
        %1195 = vdwg.mxu0
        %1196 = vmatprep.subr.bf16.mxu0 %v1068
        %1197 = vmatpush1.bf16.msra.mxu0 %v1067
        %1198 = vmatprep.subr.bf16.mxu0 %v1080
        %1199 = vmatpush1.bf16.msra.mxu0 %v1079
        %1200 = vmatprep.subr.bf16.mxu0 0
        %1201 = vmatpush1.bf16.msra.mxu0 0
        %1202 = vmatprep.subr.bf16.mxu0 0
        %1203 = vmatpush1.bf16.msra.mxu0 0
        %1204 = vmatprep.subr.bf16.mxu0 0
        %1205 = vmatpush1.bf16.msra.mxu0 0
        %1206 = vmatprep.subr.bf16.mxu0 0
        %1207 = vmatpush1.bf16.msra.mxu0 0
        %1208 = vmatprep.subr.bf16.mxu0 0
        %1209 = vmatpush1.bf16.msra.mxu0 0
        %1210 = vmatprep.subr.bf16.mxu0 0
        %1211 = vmatpush1.bf16.msra.mxu0 0
        %1212 = vmatprep.subr.bf16.mxu0 0
        %1213 = vmatpush1.bf16.msra.mxu0 0
        %1214 = vmatprep.subr.bf16.mxu0 0
        %1215 = vmatpush1.bf16.msra.mxu0 0
        %1216 = vmatprep.subr.bf16.mxu0 0
        %1217 = vmatpush1.bf16.msra.mxu0 0
        %1218 = vmatprep.subr.bf16.mxu0 0
        %1219 = vmatpush1.bf16.msra.mxu0 0
        %1220 = vmatprep.subr.bf16.mxu0 0
        %1221 = vmatpush1.bf16.msra.mxu0 0
        %1222 = vmatprep.subr.bf16.mxu0 0
        %1223 = vmatpush1.bf16.msra.mxu0 0
        %1224 = vmatprep.subr.bf16.mxu0 0
        %1225 = vmatpush1.bf16.msra.mxu0 0
        %1226 = vmatprep.subr.bf16.mxu0 0
        %1227 = vmatpush1.bf16.msra.mxu0 0
        %1228 = vmatprep.mubr.bf16.mxu0 0
        %1229 = vmatmul.mubr.bf16.gmra.mrb[0].mxu0 %v1112
        %v1230 = vpop.f32.mrb[0].mxu0
        %v1231 = vadd.f32 %v962, %v1230
        %v1232 = vpop.f32.mrb[0].mxu0
        %v1233 = vadd.f32 %v966, %v1232
        %v1234 = vpop.f32.mrb[0].mxu0
        %v1235 = vpop.f32.mrb[0].mxu0
        %1236 = vdwg.mxu0
        %1237 = vmatprep.subr.bf16.mxu0 %v1070
        %1238 = vmatpush1.bf16.msra.mxu0 %v1069
        %1239 = vmatprep.subr.bf16.mxu0 %v1082
        %1240 = vmatpush1.bf16.msra.mxu0 %v1081
        %1241 = vmatprep.subr.bf16.mxu0 0
        %1242 = vmatpush1.bf16.msra.mxu0 0
        %1243 = vmatprep.subr.bf16.mxu0 0
        %1244 = vmatpush1.bf16.msra.mxu0 0
        %1245 = vmatprep.subr.bf16.mxu0 0
        %1246 = vmatpush1.bf16.msra.mxu0 0
        %1247 = vmatprep.subr.bf16.mxu0 0
        %1248 = vmatpush1.bf16.msra.mxu0 0
        %1249 = vmatprep.subr.bf16.mxu0 0
        %1250 = vmatpush1.bf16.msra.mxu0 0
        %1251 = vmatprep.subr.bf16.mxu0 0
        %1252 = vmatpush1.bf16.msra.mxu0 0
        %1253 = vmatprep.subr.bf16.mxu0 0
        %1254 = vmatpush1.bf16.msra.mxu0 0
        %1255 = vmatprep.subr.bf16.mxu0 0
        %1256 = vmatpush1.bf16.msra.mxu0 0
        %1257 = vmatprep.subr.bf16.mxu0 0
        %1258 = vmatpush1.bf16.msra.mxu0 0
        %1259 = vmatprep.subr.bf16.mxu0 0
        %1260 = vmatpush1.bf16.msra.mxu0 0
        %1261 = vmatprep.subr.bf16.mxu0 0
        %1262 = vmatpush1.bf16.msra.mxu0 0
        %1263 = vmatprep.subr.bf16.mxu0 0
        %1264 = vmatpush1.bf16.msra.mxu0 0
        %1265 = vmatprep.subr.bf16.mxu0 0
        %1266 = vmatpush1.bf16.msra.mxu0 0
        %1267 = vmatprep.subr.bf16.mxu0 0
        %1268 = vmatpush1.bf16.msra.mxu0 0
        %1269 = vmatprep.mubr.bf16.mxu0 0
        %1270 = vmatmul.mubr.bf16.gmra.mrb[0].mxu0 %v1112
        %v1271 = vpop.f32.mrb[0].mxu0
        %v1272 = vadd.f32 %v970, %v1271
        %v1273 = vpop.f32.mrb[0].mxu0
        %v1274 = vadd.f32 %v974, %v1273
        %v1275 = vpop.f32.mrb[0].mxu0
        %v1276 = vpop.f32.mrb[0].mxu0
        %1277 = vdwg.mxu0
        %1278 = vmatprep.subr.bf16.mxu0 %v1072
        %1279 = vmatpush1.bf16.msra.mxu0 %v1071
        %1280 = vmatprep.subr.bf16.mxu0 %v1084
        %1281 = vmatpush1.bf16.msra.mxu0 %v1083
        %1282 = vmatprep.subr.bf16.mxu0 0
        %1283 = vmatpush1.bf16.msra.mxu0 0
        %1284 = vmatprep.subr.bf16.mxu0 0
        %1285 = vmatpush1.bf16.msra.mxu0 0
        %1286 = vmatprep.subr.bf16.mxu0 0
        %1287 = vmatpush1.bf16.msra.mxu0 0
        %1288 = vmatprep.subr.bf16.mxu0 0
        %1289 = vmatpush1.bf16.msra.mxu0 0
        %1290 = vmatprep.subr.bf16.mxu0 0
        %1291 = vmatpush1.bf16.msra.mxu0 0
        %1292 = vmatprep.subr.bf16.mxu0 0
        %1293 = vmatpush1.bf16.msra.mxu0 0
        %1294 = vmatprep.subr.bf16.mxu0 0
        %1295 = vmatpush1.bf16.msra.mxu0 0
        %1296 = vmatprep.subr.bf16.mxu0 0
        %1297 = vmatpush1.bf16.msra.mxu0 0
        %1298 = vmatprep.subr.bf16.mxu0 0
        %1299 = vmatpush1.bf16.msra.mxu0 0
        %1300 = vmatprep.subr.bf16.mxu0 0
        %1301 = vmatpush1.bf16.msra.mxu0 0
        %1302 = vmatprep.subr.bf16.mxu0 0
        %1303 = vmatpush1.bf16.msra.mxu0 0
        %1304 = vmatprep.subr.bf16.mxu0 0
        %1305 = vmatpush1.bf16.msra.mxu0 0
        %1306 = vmatprep.subr.bf16.mxu0 0
        %1307 = vmatpush1.bf16.msra.mxu0 0
        %1308 = vmatprep.subr.bf16.mxu0 0
        %1309 = vmatpush1.bf16.msra.mxu0 0
        %1310 = vmatprep.mubr.bf16.mxu0 0
        %1311 = vmatmul.mubr.bf16.gmra.mrb[0].mxu0 %v1112
        %v1312 = vpop.f32.mrb[0].mxu0
        %v1313 = vadd.f32 %v978, %v1312
        %v1314 = vpop.f32.mrb[0].mxu0
        %v1315 = vadd.f32 %v982, %v1314
        %v1316 = vpop.f32.mrb[0].mxu0
        %v1317 = vpop.f32.mrb[0].mxu0
        %1318 = vdwg.mxu0
        %1319 = vmatprep.subr.bf16.mxu0 %v1074
        %1320 = vmatpush1.bf16.msra.mxu0 %v1073
        %1321 = vmatprep.subr.bf16.mxu0 %v1086
        %1322 = vmatpush1.bf16.msra.mxu0 %v1085
        %1323 = vmatprep.subr.bf16.mxu0 0
        %1324 = vmatpush1.bf16.msra.mxu0 0
        %1325 = vmatprep.subr.bf16.mxu0 0
        %1326 = vmatpush1.bf16.msra.mxu0 0
        %1327 = vmatprep.subr.bf16.mxu0 0
        %1328 = vmatpush1.bf16.msra.mxu0 0
        %1329 = vmatprep.subr.bf16.mxu0 0
        %1330 = vmatpush1.bf16.msra.mxu0 0
        %1331 = vmatprep.subr.bf16.mxu0 0
        %1332 = vmatpush1.bf16.msra.mxu0 0
        %1333 = vmatprep.subr.bf16.mxu0 0
        %1334 = vmatpush1.bf16.msra.mxu0 0
        %1335 = vmatprep.subr.bf16.mxu0 0
        %1336 = vmatpush1.bf16.msra.mxu0 0
        %1337 = vmatprep.subr.bf16.mxu0 0
        %1338 = vmatpush1.bf16.msra.mxu0 0
        %1339 = vmatprep.subr.bf16.mxu0 0
        %1340 = vmatpush1.bf16.msra.mxu0 0
        %1341 = vmatprep.subr.bf16.mxu0 0
        %1342 = vmatpush1.bf16.msra.mxu0 0
        %1343 = vmatprep.subr.bf16.mxu0 0
        %1344 = vmatpush1.bf16.msra.mxu0 0
        %1345 = vmatprep.subr.bf16.mxu0 0
        %1346 = vmatpush1.bf16.msra.mxu0 0
        %1347 = vmatprep.subr.bf16.mxu0 0
        %1348 = vmatpush1.bf16.msra.mxu0 0
        %1349 = vmatprep.subr.bf16.mxu0 0
        %1350 = vmatpush1.bf16.msra.mxu0 0
        %1351 = vmatprep.mubr.bf16.mxu0 0
        %1352 = vmatmul.mubr.bf16.gmra.mrb[0].mxu0 %v1112
        %v1353 = vpop.f32.mrb[0].mxu0
        %v1354 = vadd.f32 %v986, %v1353
        %v1355 = vpop.f32.mrb[0].mxu0
        %v1356 = vadd.f32 %v990, %v1355
        %v1357 = vpop.f32.mrb[0].mxu0
        %v1358 = vpop.f32.mrb[0].mxu0
        %1359 = vdwg.mxu0
        %vm1360 = vcmp.ge.f32.partialorder %v1149, 0.0
        %vm1361 = vcmp.ge.f32.partialorder %v1151, 0.0
        %vm1362 = vcmp.ge.f32.partialorder %v1190, 0.0
        %vm1363 = vcmp.ge.f32.partialorder %v1192, 0.0
        %vm1364 = vcmp.ge.f32.partialorder %v1231, 0.0
        %vm1365 = vcmp.ge.f32.partialorder %v1233, 0.0
        %vm1366 = vcmp.ge.f32.partialorder %v1272, 0.0
        %vm1367 = vcmp.ge.f32.partialorder %v1274, 0.0
        %vm1368 = vcmp.ge.f32.partialorder %v1313, 0.0
        %vm1369 = vcmp.ge.f32.partialorder %v1315, 0.0
        %vm1370 = vcmp.ge.f32.partialorder %v1354, 0.0
        %vm1371 = vcmp.ge.f32.partialorder %v1356, 0.0
        %v1372 = vlaneseq
        %v1373 = vshrl.u32 %v1372, 7
        %v1374 = vsub.s32 1, %v1373
        %v1375 = vrot.slane %v852, %v1374
        %v1376 = vlaneseq
        %v1377 = vshrl.u32 %v1376, 7
        %v1378 = vsub.s32 3, %v1377
        %v1379 = vrot.slane %v852, %v1378
        %v1380 = vlaneseq
        %v1381 = vshrl.u32 %v1380, 7
        %v1382 = vsub.s32 5, %v1381
        %v1383 = vrot.slane %v852, %v1382
        %v1384 = vlaneseq
        %v1385 = vshrl.u32 %v1384, 7
        %v1386 = vsub.s32 7, %v1385
        %v1387 = vrot.slane %v852, %v1386
        %v1388 = vlaneseq
        %v1389 = vshrl.u32 %v1388, 7
        %v1390 = vsub.s32 1, %v1389
        %v1391 = vrot.slane %v853, %v1390
        %v1392 = vlaneseq
        %v1393 = vshrl.u32 %v1392, 7
        %v1394 = vsub.s32 3, %v1393
        %v1395 = vrot.slane %v853, %v1394
        %v1396 = vlaneseq
        %v1397 = vshrl.u32 %v1396, 7
        %v1398 = vsub.s32 5, %v1397
        %v1399 = vrot.slane %v853, %v1398
        %v1400 = vlaneseq
        %v1401 = vshrl.u32 %v1400, 7
        %v1402 = vsub.s32 7, %v1401
        %v1403 = vrot.slane %v853, %v1402
        %v1404 = vlaneseq
        %v1405 = vshrl.u32 %v1404, 7
        %v1406 = vsub.s32 1, %v1405
        %v1407 = vrot.slane %v854, %v1406
        %v1408 = vlaneseq
        %v1409 = vshrl.u32 %v1408, 7
        %v1410 = vsub.s32 3, %v1409
        %v1411 = vrot.slane %v854, %v1410
        %v1412 = vlaneseq
        %v1413 = vshrl.u32 %v1412, 7
        %v1414 = vsub.s32 5, %v1413
        %v1415 = vrot.slane %v854, %v1414
        %v1416 = vlaneseq
        %v1417 = vshrl.u32 %v1416, 7
        %v1418 = vsub.s32 7, %v1417
        %v1419 = vrot.slane %v854, %v1418
        %v1432 = vlaneseq
        %v1433 = vshrl.u32 %v1432, 7
        %v1434 = vsub.s32 1, %v1433
        %v1435 = vrot.slane %v1375, %v1434
        %v1436 = vlaneseq
        %v1437 = vshrl.u32 %v1436, 7
        %v1438 = vsub.s32 1, %v1437
        %v1439 = vrot.slane %v1379, %v1438
        %v1440 = vlaneseq
        %v1441 = vshrl.u32 %v1440, 7
        %v1442 = vsub.s32 1, %v1441
        %v1443 = vrot.slane %v1383, %v1442
        %v1444 = vlaneseq
        %v1445 = vshrl.u32 %v1444, 7
        %v1446 = vsub.s32 1, %v1445
        %v1447 = vrot.slane %v1387, %v1446
        %v1448 = vlaneseq
        %v1449 = vshrl.u32 %v1448, 7
        %v1450 = vsub.s32 1, %v1449
        %v1451 = vrot.slane %v1391, %v1450
        %v1452 = vlaneseq
        %v1453 = vshrl.u32 %v1452, 7
        %v1454 = vsub.s32 1, %v1453
        %v1455 = vrot.slane %v1395, %v1454
        %v1456 = vlaneseq
        %v1457 = vshrl.u32 %v1456, 7
        %v1458 = vsub.s32 1, %v1457
        %v1459 = vrot.slane %v1399, %v1458
        %v1460 = vlaneseq
        %v1461 = vshrl.u32 %v1460, 7
        %v1462 = vsub.s32 1, %v1461
        %v1463 = vrot.slane %v1403, %v1462
        %v1464 = vlaneseq
        %v1465 = vshrl.u32 %v1464, 7
        %v1466 = vsub.s32 1, %v1465
        %v1467 = vrot.slane %v1407, %v1466
        %v1468 = vlaneseq
        %v1469 = vshrl.u32 %v1468, 7
        %v1470 = vsub.s32 1, %v1469
        %v1471 = vrot.slane %v1411, %v1470
        %v1472 = vlaneseq
        %v1473 = vshrl.u32 %v1472, 7
        %v1474 = vsub.s32 1, %v1473
        %v1475 = vrot.slane %v1415, %v1474
        %v1476 = vlaneseq
        %v1477 = vshrl.u32 %v1476, 7
        %v1478 = vsub.s32 1, %v1477
        %v1479 = vrot.slane %v1419, %v1478
        %v1480 = vmul.f32 %v1435, %v1149
        %v1481 = vmul.f32 %v1439, %v1151
        %v1482 = vmul.f32 %v1443, %v1190
        %v1483 = vmul.f32 %v1447, %v1192
        %v1484 = vmul.f32 %v1451, %v1231
        %v1485 = vmul.f32 %v1455, %v1233
        %v1486 = vmul.f32 %v1459, %v1272
        %v1487 = vmul.f32 %v1463, %v1274
        %v1488 = vmul.f32 %v1467, %v1313
        %v1489 = vmul.f32 %v1471, %v1315
        %v1490 = vmul.f32 %v1475, %v1354
        %v1491 = vmul.f32 %v1479, %v1356
        %v1492 = vsel %vm1360, %v1149, %v1480
        %v1493 = vsel %vm1361, %v1151, %v1481
        %v1494 = vsel %vm1362, %v1190, %v1482
        %v1495 = vsel %vm1363, %v1192, %v1483
        %v1496 = vsel %vm1364, %v1231, %v1484
        %v1497 = vsel %vm1365, %v1233, %v1485
        %v1498 = vsel %vm1366, %v1272, %v1486
        %v1499 = vsel %vm1367, %v1274, %v1487
        %v1500 = vsel %vm1368, %v1313, %v1488
        %v1501 = vsel %vm1369, %v1315, %v1489
        %v1502 = vsel %vm1370, %v1354, %v1490
        %v1503 = vsel %vm1371, %v1356, %v1491
        %v1504 = vld [vmem:[%s362] sm:$0xff]
        %v1505 = vld [vmem:[%s362 + $0x8] sm:$0xff]
        %v1506 = vld [vmem:[%s362 + $0x10] sm:$0xff]
        %v1507 = vld [vmem:[%s362 + $0x18] sm:$0xff]
        %v1508 = vld [vmem:[%s362 + $0x20] sm:$0xff]
        %v1509 = vld [vmem:[%s362 + $0x28] sm:$0xff]
        %v1510 = vld [vmem:[%s410] sm:$0x1]
        %v1511 = vld [vmem:[%s410 + $0x1] sm:$0x1]
        %v1512 = vld [vmem:[%s410 + $0x2] sm:$0x1]
        %v1513 = vpack.c.bf16 %v1492, %v1492
        %v1514 = vpack.c.bf16 %v1493, %v1493
        %v1515 = vpack.c.bf16 %v1494, %v1494
        %v1516 = vpack.c.bf16 %v1495, %v1495
        %v1517 = vpack.c.bf16 %v1496, %v1496
        %v1518 = vpack.c.bf16 %v1497, %v1497
        %v1519 = vpack.c.bf16 %v1498, %v1498
        %v1520 = vpack.c.bf16 %v1499, %v1499
        %v1521 = vpack.c.bf16 %v1500, %v1500
        %v1522 = vpack.c.bf16 %v1501, %v1501
        %v1523 = vpack.c.bf16 %v1502, %v1502
        %v1524 = vpack.c.bf16 %v1503, %v1503
        %v1526 = vlaneseq
        %v1527 = vshrl.u32 %v1526, 7
        %v1528 = vsub.s32 0, %v1527
        %v1529 = vrot.slane %v1510, %v1528
        %v1533 = vunpack.c.l.b16 %v1504
        %v1534 = vunpack.c.h.b16 %v1504
        %v1535 = vunpack.c.l.b16 %v1505
        %v1536 = vunpack.c.h.b16 %v1505
        %v1537 = vpack.c.b16 %v1533, %v1533
        %v1538 = vpack.c.b16 %v1534, %v1534
        %v1539 = vpack.c.b16 %v1535, %v1535
        %v1540 = vpack.c.b16 %v1536, %v1536
        %1545 = vmatprep.subr.bf16.mxu0 %v1538
        %1546 = vmatpush1.bf16.xpose.msra.mxu0 %v1537
        %1547 = vmatprep.subr.bf16.mxu0 0
        %1548 = vmatpush1.bf16.xpose.msra.mxu0 0
        %1549 = vmatprep.subr.bf16.mxu0 0
        %1550 = vmatpush1.bf16.xpose.msra.mxu0 0
        %1551 = vmatprep.subr.bf16.mxu0 0
        %1552 = vmatpush1.bf16.xpose.msra.mxu0 0
        %1553 = vmatprep.subr.bf16.mxu0 0
        %1554 = vmatpush1.bf16.xpose.msra.mxu0 0
        %1555 = vmatprep.subr.bf16.mxu0 0
        %1556 = vmatpush1.bf16.xpose.msra.mxu0 0
        %1557 = vmatprep.subr.bf16.mxu0 0
        %1558 = vmatpush1.bf16.xpose.msra.mxu0 0
        %1559 = vmatprep.subr.bf16.mxu0 0
        %1560 = vmatpush1.bf16.xpose.msra.mxu0 0
        %1561 = vmatprep.subr.bf16.mxu0 0
        %1562 = vmatpush1.bf16.xpose.msra.mxu0 0
        %1563 = vmatprep.subr.bf16.mxu0 0
        %1564 = vmatpush1.bf16.xpose.msra.mxu0 0
        %1565 = vmatprep.subr.bf16.mxu0 0
        %1566 = vmatpush1.bf16.xpose.msra.mxu0 0
        %1567 = vmatprep.subr.bf16.mxu0 0
        %1568 = vmatpush1.bf16.xpose.msra.mxu0 0
        %1569 = vmatprep.subr.bf16.mxu0 0
        %1570 = vmatpush1.bf16.xpose.msra.mxu0 0
        %1571 = vmatprep.subr.bf16.mxu0 0
        %1572 = vmatpush1.bf16.xpose.msra.mxu0 0
        %1573 = vmatprep.subr.bf16.mxu0 0
        %1574 = vmatpush1.bf16.xpose.msra.mxu0 0
        %1575 = vmatprep.subr.bf16.mxu0 0
        %1576 = vmatpush1.bf16.xpose.msra.mxu0 0
        %1577 = vmatprep.mubr.bf16.mxu0 %v1514
        %1578 = vmatmul.mubr.bf16.gmra.mrb[0].mxu0 %v1513
        %v1579 = vpop.f32.mrb[0].mxu0
        %v1580 = vadd.f32 %v1529, %v1579
        %v1581 = vpop.f32.mrb[0].mxu0
        %v1582 = vpop.f32.mrb[0].mxu0
        %v1583 = vpop.f32.mrb[0].mxu0
        %1584 = vdwg.mxu0
        %1585 = vmatprep.subr.bf16.mxu0 %v1540
        %1586 = vmatpush1.bf16.xpose.msra.mxu0 %v1539
        %1587 = vmatprep.subr.bf16.mxu0 0
        %1588 = vmatpush1.bf16.xpose.msra.mxu0 0
        %1589 = vmatprep.subr.bf16.mxu0 0
        %1590 = vmatpush1.bf16.xpose.msra.mxu0 0
        %1591 = vmatprep.subr.bf16.mxu0 0
        %1592 = vmatpush1.bf16.xpose.msra.mxu0 0
        %1593 = vmatprep.subr.bf16.mxu0 0
        %1594 = vmatpush1.bf16.xpose.msra.mxu0 0
        %1595 = vmatprep.subr.bf16.mxu0 0
        %1596 = vmatpush1.bf16.xpose.msra.mxu0 0
        %1597 = vmatprep.subr.bf16.mxu0 0
        %1598 = vmatpush1.bf16.xpose.msra.mxu0 0
        %1599 = vmatprep.subr.bf16.mxu0 0
        %1600 = vmatpush1.bf16.xpose.msra.mxu0 0
        %1601 = vmatprep.subr.bf16.mxu0 0
        %1602 = vmatpush1.bf16.xpose.msra.mxu0 0
        %1603 = vmatprep.subr.bf16.mxu0 0
        %1604 = vmatpush1.bf16.xpose.msra.mxu0 0
        %1605 = vmatprep.subr.bf16.mxu0 0
        %1606 = vmatpush1.bf16.xpose.msra.mxu0 0
        %1607 = vmatprep.subr.bf16.mxu0 0
        %1608 = vmatpush1.bf16.xpose.msra.mxu0 0
        %1609 = vmatprep.subr.bf16.mxu0 0
        %1610 = vmatpush1.bf16.xpose.msra.mxu0 0
        %1611 = vmatprep.subr.bf16.mxu0 0
        %1612 = vmatpush1.bf16.xpose.msra.mxu0 0
        %1613 = vmatprep.subr.bf16.mxu0 0
        %1614 = vmatpush1.bf16.xpose.msra.mxu0 0
        %1615 = vmatprep.subr.bf16.mxu0 0
        %1616 = vmatpush1.bf16.xpose.msra.mxu0 0
        %1617 = vmatprep.mubr.bf16.mxu0 %v1516
        %1618 = vmatmul.mubr.bf16.gmra.mrb[0].mxu0 %v1515
        %v1619 = vpop.f32.mrb[0].mxu0
        %v1620 = vadd.f32 %v1580, %v1619
        %v1621 = vpop.f32.mrb[0].mxu0
        %v1622 = vpop.f32.mrb[0].mxu0
        %v1623 = vpop.f32.mrb[0].mxu0
        %1624 = vdwg.mxu0
        %v1626 = vlaneseq
        %v1627 = vshrl.u32 %v1626, 7
        %v1628 = vsub.s32 0, %v1627
        %v1629 = vrot.slane %v1511, %v1628
        %v1633 = vunpack.c.l.b16 %v1506
        %v1634 = vunpack.c.h.b16 %v1506
        %v1635 = vunpack.c.l.b16 %v1507
        %v1636 = vunpack.c.h.b16 %v1507
        %v1637 = vpack.c.b16 %v1633, %v1633
        %v1638 = vpack.c.b16 %v1634, %v1634
        %v1639 = vpack.c.b16 %v1635, %v1635
        %v1640 = vpack.c.b16 %v1636, %v1636
        %1645 = vmatprep.subr.bf16.mxu0 %v1638
        %1646 = vmatpush1.bf16.xpose.msra.mxu0 %v1637
        %1647 = vmatprep.subr.bf16.mxu0 0
        %1648 = vmatpush1.bf16.xpose.msra.mxu0 0
        %1649 = vmatprep.subr.bf16.mxu0 0
        %1650 = vmatpush1.bf16.xpose.msra.mxu0 0
        %1651 = vmatprep.subr.bf16.mxu0 0
        %1652 = vmatpush1.bf16.xpose.msra.mxu0 0
        %1653 = vmatprep.subr.bf16.mxu0 0
        %1654 = vmatpush1.bf16.xpose.msra.mxu0 0
        %1655 = vmatprep.subr.bf16.mxu0 0
        %1656 = vmatpush1.bf16.xpose.msra.mxu0 0
        %1657 = vmatprep.subr.bf16.mxu0 0
        %1658 = vmatpush1.bf16.xpose.msra.mxu0 0
        %1659 = vmatprep.subr.bf16.mxu0 0
        %1660 = vmatpush1.bf16.xpose.msra.mxu0 0
        %1661 = vmatprep.subr.bf16.mxu0 0
        %1662 = vmatpush1.bf16.xpose.msra.mxu0 0
        %1663 = vmatprep.subr.bf16.mxu0 0
        %1664 = vmatpush1.bf16.xpose.msra.mxu0 0
        %1665 = vmatprep.subr.bf16.mxu0 0
        %1666 = vmatpush1.bf16.xpose.msra.mxu0 0
        %1667 = vmatprep.subr.bf16.mxu0 0
        %1668 = vmatpush1.bf16.xpose.msra.mxu0 0
        %1669 = vmatprep.subr.bf16.mxu0 0
        %1670 = vmatpush1.bf16.xpose.msra.mxu0 0
        %1671 = vmatprep.subr.bf16.mxu0 0
        %1672 = vmatpush1.bf16.xpose.msra.mxu0 0
        %1673 = vmatprep.subr.bf16.mxu0 0
        %1674 = vmatpush1.bf16.xpose.msra.mxu0 0
        %1675 = vmatprep.subr.bf16.mxu0 0
        %1676 = vmatpush1.bf16.xpose.msra.mxu0 0
        %1677 = vmatprep.mubr.bf16.mxu0 %v1518
        %1678 = vmatmul.mubr.bf16.gmra.mrb[0].mxu0 %v1517
        %v1679 = vpop.f32.mrb[0].mxu0
        %v1680 = vadd.f32 %v1629, %v1679
        %v1681 = vpop.f32.mrb[0].mxu0
        %v1682 = vpop.f32.mrb[0].mxu0
        %v1683 = vpop.f32.mrb[0].mxu0
        %1684 = vdwg.mxu0
        %1685 = vmatprep.subr.bf16.mxu0 %v1640
        %1686 = vmatpush1.bf16.xpose.msra.mxu0 %v1639
        %1687 = vmatprep.subr.bf16.mxu0 0
        %1688 = vmatpush1.bf16.xpose.msra.mxu0 0
        %1689 = vmatprep.subr.bf16.mxu0 0
        %1690 = vmatpush1.bf16.xpose.msra.mxu0 0
        %1691 = vmatprep.subr.bf16.mxu0 0
        %1692 = vmatpush1.bf16.xpose.msra.mxu0 0
        %1693 = vmatprep.subr.bf16.mxu0 0
        %1694 = vmatpush1.bf16.xpose.msra.mxu0 0
        %1695 = vmatprep.subr.bf16.mxu0 0
        %1696 = vmatpush1.bf16.xpose.msra.mxu0 0
        %1697 = vmatprep.subr.bf16.mxu0 0
        %1698 = vmatpush1.bf16.xpose.msra.mxu0 0
        %1699 = vmatprep.subr.bf16.mxu0 0
        %1700 = vmatpush1.bf16.xpose.msra.mxu0 0
        %1701 = vmatprep.subr.bf16.mxu0 0
        %1702 = vmatpush1.bf16.xpose.msra.mxu0 0
        %1703 = vmatprep.subr.bf16.mxu0 0
        %1704 = vmatpush1.bf16.xpose.msra.mxu0 0
        %1705 = vmatprep.subr.bf16.mxu0 0
        %1706 = vmatpush1.bf16.xpose.msra.mxu0 0
        %1707 = vmatprep.subr.bf16.mxu0 0
        %1708 = vmatpush1.bf16.xpose.msra.mxu0 0
        %1709 = vmatprep.subr.bf16.mxu0 0
        %1710 = vmatpush1.bf16.xpose.msra.mxu0 0
        %1711 = vmatprep.subr.bf16.mxu0 0
        %1712 = vmatpush1.bf16.xpose.msra.mxu0 0
        %1713 = vmatprep.subr.bf16.mxu0 0
        %1714 = vmatpush1.bf16.xpose.msra.mxu0 0
        %1715 = vmatprep.subr.bf16.mxu0 0
        %1716 = vmatpush1.bf16.xpose.msra.mxu0 0
        %1717 = vmatprep.mubr.bf16.mxu0 %v1520
        %1718 = vmatmul.mubr.bf16.gmra.mrb[0].mxu0 %v1519
        %v1719 = vpop.f32.mrb[0].mxu0
        %v1720 = vadd.f32 %v1680, %v1719
        %v1721 = vpop.f32.mrb[0].mxu0
        %v1722 = vpop.f32.mrb[0].mxu0
        %v1723 = vpop.f32.mrb[0].mxu0
        %1724 = vdwg.mxu0
        %v1726 = vlaneseq
        %v1727 = vshrl.u32 %v1726, 7
        %v1728 = vsub.s32 0, %v1727
        %v1729 = vrot.slane %v1512, %v1728
        %v1733 = vunpack.c.l.b16 %v1508
        %v1734 = vunpack.c.h.b16 %v1508
        %v1735 = vunpack.c.l.b16 %v1509
        %v1736 = vunpack.c.h.b16 %v1509
        %v1737 = vpack.c.b16 %v1733, %v1733
        %v1738 = vpack.c.b16 %v1734, %v1734
        %v1739 = vpack.c.b16 %v1735, %v1735
        %v1740 = vpack.c.b16 %v1736, %v1736
        %1745 = vmatprep.subr.bf16.mxu0 %v1738
        %1746 = vmatpush1.bf16.xpose.msra.mxu0 %v1737
        %1747 = vmatprep.subr.bf16.mxu0 0
        %1748 = vmatpush1.bf16.xpose.msra.mxu0 0
        %1749 = vmatprep.subr.bf16.mxu0 0
        %1750 = vmatpush1.bf16.xpose.msra.mxu0 0
        %1751 = vmatprep.subr.bf16.mxu0 0
        %1752 = vmatpush1.bf16.xpose.msra.mxu0 0
        %1753 = vmatprep.subr.bf16.mxu0 0
        %1754 = vmatpush1.bf16.xpose.msra.mxu0 0
        %1755 = vmatprep.subr.bf16.mxu0 0
        %1756 = vmatpush1.bf16.xpose.msra.mxu0 0
        %1757 = vmatprep.subr.bf16.mxu0 0
        %1758 = vmatpush1.bf16.xpose.msra.mxu0 0
        %1759 = vmatprep.subr.bf16.mxu0 0
        %1760 = vmatpush1.bf16.xpose.msra.mxu0 0
        %1761 = vmatprep.subr.bf16.mxu0 0
        %1762 = vmatpush1.bf16.xpose.msra.mxu0 0
        %1763 = vmatprep.subr.bf16.mxu0 0
        %1764 = vmatpush1.bf16.xpose.msra.mxu0 0
        %1765 = vmatprep.subr.bf16.mxu0 0
        %1766 = vmatpush1.bf16.xpose.msra.mxu0 0
        %1767 = vmatprep.subr.bf16.mxu0 0
        %1768 = vmatpush1.bf16.xpose.msra.mxu0 0
        %1769 = vmatprep.subr.bf16.mxu0 0
        %1770 = vmatpush1.bf16.xpose.msra.mxu0 0
        %1771 = vmatprep.subr.bf16.mxu0 0
        %1772 = vmatpush1.bf16.xpose.msra.mxu0 0
        %1773 = vmatprep.subr.bf16.mxu0 0
        %1774 = vmatpush1.bf16.xpose.msra.mxu0 0
        %1775 = vmatprep.subr.bf16.mxu0 0
        %1776 = vmatpush1.bf16.xpose.msra.mxu0 0
        %1777 = vmatprep.mubr.bf16.mxu0 %v1522
        %1778 = vmatmul.mubr.bf16.gmra.mrb[0].mxu0 %v1521
        %v1779 = vpop.f32.mrb[0].mxu0
        %v1780 = vadd.f32 %v1729, %v1779
        %v1781 = vpop.f32.mrb[0].mxu0
        %v1782 = vpop.f32.mrb[0].mxu0
        %v1783 = vpop.f32.mrb[0].mxu0
        %1784 = vdwg.mxu0
        %1785 = vmatprep.subr.bf16.mxu0 %v1740
        %1786 = vmatpush1.bf16.xpose.msra.mxu0 %v1739
        %1787 = vmatprep.subr.bf16.mxu0 0
        %1788 = vmatpush1.bf16.xpose.msra.mxu0 0
        %1789 = vmatprep.subr.bf16.mxu0 0
        %1790 = vmatpush1.bf16.xpose.msra.mxu0 0
        %1791 = vmatprep.subr.bf16.mxu0 0
        %1792 = vmatpush1.bf16.xpose.msra.mxu0 0
        %1793 = vmatprep.subr.bf16.mxu0 0
        %1794 = vmatpush1.bf16.xpose.msra.mxu0 0
        %1795 = vmatprep.subr.bf16.mxu0 0
        %1796 = vmatpush1.bf16.xpose.msra.mxu0 0
        %1797 = vmatprep.subr.bf16.mxu0 0
        %1798 = vmatpush1.bf16.xpose.msra.mxu0 0
        %1799 = vmatprep.subr.bf16.mxu0 0
        %1800 = vmatpush1.bf16.xpose.msra.mxu0 0
        %1801 = vmatprep.subr.bf16.mxu0 0
        %1802 = vmatpush1.bf16.xpose.msra.mxu0 0
        %1803 = vmatprep.subr.bf16.mxu0 0
        %1804 = vmatpush1.bf16.xpose.msra.mxu0 0
        %1805 = vmatprep.subr.bf16.mxu0 0
        %1806 = vmatpush1.bf16.xpose.msra.mxu0 0
        %1807 = vmatprep.subr.bf16.mxu0 0
        %1808 = vmatpush1.bf16.xpose.msra.mxu0 0
        %1809 = vmatprep.subr.bf16.mxu0 0
        %1810 = vmatpush1.bf16.xpose.msra.mxu0 0
        %1811 = vmatprep.subr.bf16.mxu0 0
        %1812 = vmatpush1.bf16.xpose.msra.mxu0 0
        %1813 = vmatprep.subr.bf16.mxu0 0
        %1814 = vmatpush1.bf16.xpose.msra.mxu0 0
        %1815 = vmatprep.subr.bf16.mxu0 0
        %1816 = vmatpush1.bf16.xpose.msra.mxu0 0
        %1817 = vmatprep.mubr.bf16.mxu0 %v1524
        %1818 = vmatmul.mubr.bf16.gmra.mrb[0].mxu0 %v1523
        %v1819 = vpop.f32.mrb[0].mxu0
        %v1820 = vadd.f32 %v1780, %v1819
        %v1821 = vpop.f32.mrb[0].mxu0
        %v1822 = vpop.f32.mrb[0].mxu0
        %v1823 = vpop.f32.mrb[0].mxu0
        %1824 = vdwg.mxu0
        %1826 = vrot.lane.b32.xlu0 %v1720, 8
        %v1827 = vpop.permute.xlu0 %1826
        %1830 = vrot.lane.b32.xlu0 %v1820, 16
        %v1831 = vpop.permute.xlu0 %1830
        %vm1833 = vcmask 64512
        %v1834 = vsel %vm1833, %v1620, %v1827
        %vm1835 = vcmask 130048
        %v1836 = vsel %vm1835, %v1834, %v1831
        %vm1837 = vcmask 195584
        %1838 = vst.msk [vmem:[%s406] sm:$0xff] %vm1837, %v1836
        %s1839 = sand.u32 %s198, 1
        %s1840 = scalar_lea.sflag [#allocation4], %s1839
        %s1841 = sand.u32 %s198, 1
        %s1842 = smul.addr %s1841, 8
        %s1843 = scalar_lea.vmem [#allocation10], %s1842
        // Predicated region
        $region69: #{tpu_custom_call.1} parent=47 // pred_check
          %p1844 = pneg %p208
        $region70: #{tpu_custom_call.1} parent=47 // pred_check_branch
          %1846 = sbr.rel (%p1844) target = $region72
        $region71: #{tpu_custom_call.1} parent=47 // pred_region
          %s1848 = ssub.s32 128, 128
          %1849 = vsyncadd %s1840, %s1848
          %s1850 = smul.addr %s23, 128
          %s1851 = scalar_lea.hbm %s7, %s1850
          %s1853 = sshll.u32 %s1843, 4
          %s1854 = int_to_ptr.vmem [resolvable:$true] %s1853
          %1856 = dma.vmem_to_hbm [thread:$0]  %s1854, 128, %s1851, %s1840
        $region72: #{tpu_custom_call.1} parent=47 // pred_fallthru
          _
      $region48: #{tpu_custom_call.1} parent=5 // pred_fallthru
        _
      %p1857 = scmp.le.s32.totalorder 2, %s18
      // Predicated region
      $region73: #{tpu_custom_call.1} parent=5 // pred_check
        %p1858 = pneg %p1857
      $region74: #{tpu_custom_call.1} parent=5 // pred_check_branch
        %1860 = sbr.rel (%p1858) target = $region76
      $region75: #{tpu_custom_call.1} parent=5 // pred_region
        %s1861 = ssub.s32 %s18, 2
        // Predicated region
        $region77: #{tpu_custom_call.1} parent=75 // pred_check
          %p1862 = pneg %p214
        $region78: #{tpu_custom_call.1} parent=75 // pred_check_branch
          %1864 = sbr.rel (%p1862) target = $region80
        $region79: #{tpu_custom_call.1} parent=75 // pred_region
          %s1865 = sand.u32 %s199, 1
          %s1866 = scalar_lea.sflag [#allocation4], %s1865
          %s1867 = sand.u32 %s199, 1
          %s1868 = smul.addr %s1867, 8
          %s1869 = scalar_lea.vmem [#allocation10], %s1868
          %1870 = dma.done %s1866, 128
        $region80: #{tpu_custom_call.1} parent=75 // pred_fallthru
          _
      $region76: #{tpu_custom_call.1} parent=5 // pred_fallthru
        _
    $region6: #{tpu_custom_call.1} parent=1 // loop_footer
      %s22 = sadd.s32 1, %s18
    $region7: #{tpu_custom_call.1} parent=1 // loop_footer_branch
      %17 = sbr.rel target = $region3
    $region8: #{tpu_custom_call.1} parent=1 // loop_exit
      _
    %1871 = vsyncpa [#allocation3], 1
    %s1872 = scalar_lea.sflag [#allocation3], 1
    %1873 = vsyncpa %s1872, 1
    %1874 = vsyncpa [#allocation6], 1
    %1875 = vsyncpa [#allocation4], 1
    %s1876 = scalar_lea.sflag [#allocation4], 1
    %1877 = vsyncpa %s1876, 1

</llo_original>
